<compile_context>
chip_gen: v5e
topology: v5e:2x2
jax: 0.10.0
libtpu: 0.0.40
codegen_flags: <defaults>
</compile_context>

<pallas_src>
import functools

import jax
import jax.numpy as jnp
from jax.experimental import pallas as pl
from jax.experimental.pallas import tpu as pltpu

_LANE_TILE = 128  # Fourier modes processed per grid step (lane axis)


def _spectral_mix_kernel(xr_ref, xi_ref, wr_ref, wi_ref, or_ref, oi_ref):
    """Complex channel mix for one lane-tile of Fourier modes.

    xr/xi: (B, Cin, TM), wr/wi: (Cin, Cout, TM), out: (B, Cout, TM) with
        out[b, o, m] = sum_i x[b, i, m] * w[i, o, m]   (complex arithmetic)

    Channel counts are tiny, so this is pure lane-parallel VPU FMA work
    (modes live on the 128-lane axis); the MXU is not used.
    """
    xr = xr_ref[...]
    xi = xi_ref[...]
    wr = wr_ref[...]
    wi = wi_ref[...]
    cin = xr.shape[1]

    acc_r = jnp.zeros(or_ref.shape, jnp.float32)
    acc_i = jnp.zeros(oi_ref.shape, jnp.float32)
    for i in range(cin):  # tiny, fully unrolled
        xr_i = xr[:, i, :][:, None, :]   # (B, 1, TM)
        xi_i = xi[:, i, :][:, None, :]
        wr_i = wr[i][None, :, :]         # (1, Cout, TM)
        wi_i = wi[i][None, :, :]
        acc_r = acc_r + xr_i * wr_i - xi_i * wi_i
        acc_i = acc_i + xr_i * wi_i + xi_i * wr_i
    or_ref[...] = acc_r
    oi_ref[...] = acc_i


def _spectral_mix(xr, xi, wr, wi):
    """xr/xi: (B, Cin, Mpad); wr/wi: (Cin, Cout, Mpad) -> (B, Cout, Mpad) x2."""
    B, Cin, Mpad = xr.shape
    Cout = wr.shape[1]
    TM = _LANE_TILE
    n_tiles = Mpad // TM

    x_spec = pl.BlockSpec((B, Cin, TM), lambda m: (0, 0, m))
    w_spec = pl.BlockSpec((Cin, Cout, TM), lambda m: (0, 0, m))
    o_spec = pl.BlockSpec((B, Cout, TM), lambda m: (0, 0, m))

    return pl.pallas_call(
        _spectral_mix_kernel,
        out_shape=(
            jax.ShapeDtypeStruct((B, Cout, Mpad), jnp.float32),
            jax.ShapeDtypeStruct((B, Cout, Mpad), jnp.float32),
        ),
        grid_spec=pltpu.PrefetchScalarGridSpec(
            num_scalar_prefetch=0,
            grid=(n_tiles,),
            in_specs=[x_spec, x_spec, w_spec, w_spec],
            out_specs=[o_spec, o_spec],
        ),
        compiler_params=pltpu.CompilerParams(
            dimension_semantics=("parallel",)),
    )(xr, xi, wr, wi)


@functools.partial(jax.jit, static_argnums=(3, 4))
def spectral_conv2d(x, weights1, weights2, modes1, modes2):
    """Forward pass of SpectralConv2d.

    x:        (B, Cin, H, W) float32          (NCHW, like PyTorch)
    weights1: (Cin, Cout, modes1, modes2) complex64
    weights2: (Cin, Cout, modes1, modes2) complex64
    returns:  (B, Cout, H, W) float32
    """
    B, Cin, H, W = x.shape
    Cout = weights1.shape[1]
    Wc = W // 2 + 1
    Mc = modes1 * modes2
    M = 2 * Mc  # modes from both retained corners

    # TODO(synk): rfft2 / irfft2 remain plain-JAX (no FFT primitive in Pallas).
    x_ft = jnp.fft.rfft2(x)  # (B, Cin, H, Wc) complex64

    # Corner slices; (m1, m2) are trailing, so flattening needs no transpose.
    x1 = x_ft[:, :, :modes1, :modes2].reshape(B, Cin, Mc)       # low-low
    x2 = x_ft[:, :, H - modes1:, :modes2].reshape(B, Cin, Mc)   # high-low
    xm = jnp.concatenate([x1, x2], axis=-1)                      # (B, Cin, M)
    wm = jnp.concatenate(
        [weights1.reshape(Cin, Cout, Mc), weights2.reshape(Cin, Cout, Mc)],
        axis=-1)                                                 # (Cin, Cout, M)

    # Pad the lane (mode) axis to a multiple of 128; keep >= 2 grid tiles so
    # both v7x TensorCores get a parallel step. Padded modes carry zero input.
    n_tiles = max(2, -(-M // _LANE_TILE))
    Mpad = n_tiles * _LANE_TILE
    pad = ((0, 0), (0, 0), (0, Mpad - M))
    xr = jnp.pad(jnp.real(xm), pad)
    xi = jnp.pad(jnp.imag(xm), pad)
    wr = jnp.pad(jnp.real(wm), pad)
    wi = jnp.pad(jnp.imag(wm), pad)

    out_re, out_im = _spectral_mix(xr, xi, wr, wi)               # (B, Cout, Mpad)
    out_c = jax.lax.complex(out_re[:, :, :M], out_im[:, :, :M])  # (B, Cout, M)

    o1 = out_c[:, :, :Mc].reshape(B, Cout, modes1, modes2)
    o2 = out_c[:, :, Mc:].reshape(B, Cout, modes1, modes2)

    # Assemble out_ft without a full zeros buffer + scatter (usual FNO case:
    # modes1 <= H//2, modes2 <= Wc).
    if 2 * modes1 <= H and modes2 <= Wc:
        zc = jnp.zeros((B, Cout, modes1, Wc - modes2), jnp.complex64)
        top = jnp.concatenate([o1, zc], axis=-1)                 # rows [0, modes1)
        bot = jnp.concatenate([o2, zc], axis=-1)                 # rows [H-modes1, H)
        mid = jnp.zeros((B, Cout, H - 2 * modes1, Wc), jnp.complex64)
        out_ft = jnp.concatenate([top, mid, bot], axis=2)
    else:  # fallback with exact PyTorch overlap/overwrite semantics
        out_ft = jnp.zeros((B, Cout, H, Wc), jnp.complex64)
        out_ft = out_ft.at[:, :, :modes1, :modes2].set(o1)
        out_ft = out_ft.at[:, :, H - modes1:, :modes2].set(o2)

    return jnp.fft.irfft2(out_ft, s=(H, W))


def _reference(x, weights1, weights2, modes1, modes2):
    """Pure-JAX reference matching the PyTorch forward exactly."""
    B, Cin, H, W = x.shape
    Cout = weights1.shape[1]
    Wc = W // 2 + 1
    x_ft = jnp.fft.rfft2(x)
    out_ft = jnp.zeros((B, Cout, H, Wc), dtype=jnp.complex64)
    out_ft = out_ft.at[:, :, :modes1, :modes2].set(
        jnp.einsum('bixy,ioxy->boxy', x_ft[:, :, :modes1, :modes2], weights1))
    out_ft = out_ft.at[:, :, H - modes1:, :modes2].set(
        jnp.einsum('bixy,ioxy->boxy', x_ft[:, :, H - modes1:, :modes2], weights2))
    return jnp.fft.irfft2(out_ft, s=(H, W))


if __name__ == "__main__":
    B, Cin, Cout = 2, 4, 4
    H = W = 16
    modes1 = modes2 = 6

    key = jax.random.PRNGKey(0)
    kx, kw1r, kw1i, kw2r, kw2i = jax.random.split(key, 5)

    x = jax.random.normal(kx, (B, Cin, H, W), dtype=jnp.float32)

    scale = 1.0 / (Cin * Cout)
    # torch.rand(..., dtype=cfloat): real & imag each uniform in [0, 1).
    w1 = (scale * (jax.random.uniform(kw1r, (Cin, Cout, modes1, modes2))
                   + 1j * jax.random.uniform(kw1i, (Cin, Cout, modes1, modes2)))
          ).astype(jnp.complex64)
    w2 = (scale * (jax.random.uniform(kw2r, (Cin, Cout, modes1, modes2))
                   + 1j * jax.random.uniform(kw2i, (Cin, Cout, modes1, modes2)))
          ).astype(jnp.complex64)

    out = spectral_conv2d(x, w1, w2, modes1, modes2)
    out = jax.block_until_ready(out)

    ref = _reference(x, w1, w2, modes1, modes2)
    assert out.shape == (B, Cout, H, W)
    assert jnp.allclose(out, ref, atol=1e-4, rtol=1e-4), "mismatch vs reference"

    print("KERNEL_OK")
</pallas_src>

<mosaic_0001>
module attributes {stable_mosaic.version = 11 : i64} {
  func.func @_spectral_mix_kernel(%arg0: i32, %arg1: memref<2x4x128xf32, #tpu.memory_space<vmem>>, %arg2: memref<2x4x128xf32, #tpu.memory_space<vmem>>, %arg3: memref<4x4x128xf32, #tpu.memory_space<vmem>>, %arg4: memref<4x4x128xf32, #tpu.memory_space<vmem>>, %arg5: memref<2x4x128xf32, #tpu.memory_space<vmem>>, %arg6: memref<2x4x128xf32, #tpu.memory_space<vmem>>) attributes {dimension_semantics = [#tpu.dimension_semantics<parallel>], iteration_bounds = array<i64: 2>, scalar_prefetch = 0 : i64, scratch_operands = 0 : i64, tpu.core_type = #tpu.core_type<tc>, window_params = [{transform_indices = @transform_0, window_bounds = array<i64: 2, 4, 128>}, {transform_indices = @transform_1, window_bounds = array<i64: 2, 4, 128>}, {transform_indices = @transform_2, window_bounds = array<i64: 4, 4, 128>}, {transform_indices = @transform_3, window_bounds = array<i64: 4, 4, 128>}, {transform_indices = @transform_4, window_bounds = array<i64: 2, 4, 128>}, {transform_indices = @transform_5, window_bounds = array<i64: 2, 4, 128>}]} {
    %c0 = arith.constant 0 : index
    %c0_0 = arith.constant 0 : index
    %c0_1 = arith.constant 0 : index
    %0 = vector.load %arg1[%c0, %c0_0, %c0_1] : memref<2x4x128xf32, #tpu.memory_space<vmem>>, vector<2x4x128xf32>
    %c0_2 = arith.constant 0 : index
    %c0_3 = arith.constant 0 : index
    %c0_4 = arith.constant 0 : index
    %1 = vector.load %arg2[%c0_2, %c0_3, %c0_4] : memref<2x4x128xf32, #tpu.memory_space<vmem>>, vector<2x4x128xf32>
    %c0_5 = arith.constant 0 : index
    %c0_6 = arith.constant 0 : index
    %c0_7 = arith.constant 0 : index
    %2 = vector.load %arg3[%c0_5, %c0_6, %c0_7] : memref<4x4x128xf32, #tpu.memory_space<vmem>>, vector<4x4x128xf32>
    %c0_8 = arith.constant 0 : index
    %c0_9 = arith.constant 0 : index
    %c0_10 = arith.constant 0 : index
    %3 = vector.load %arg4[%c0_8, %c0_9, %c0_10] : memref<4x4x128xf32, #tpu.memory_space<vmem>>, vector<4x4x128xf32>
    %cst = arith.constant 0.000000e+00 : f32
    %4 = vector.broadcast %cst : f32 to vector<2x4x128xf32>
    %cst_11 = arith.constant 0.000000e+00 : f32
    %5 = vector.broadcast %cst_11 : f32 to vector<2x4x128xf32>
    %6 = vector.extract_strided_slice %0 {offsets = [0, 0, 0], sizes = [2, 1, 128], strides = [1, 1, 1]} : vector<2x4x128xf32> to vector<2x1x128xf32>
    %7 = vector.shape_cast %6 : vector<2x1x128xf32> to vector<2x128xf32>
    %8 = vector.shape_cast %7 : vector<2x128xf32> to vector<2x1x128xf32>
    %9 = vector.extract_strided_slice %1 {offsets = [0, 0, 0], sizes = [2, 1, 128], strides = [1, 1, 1]} : vector<2x4x128xf32> to vector<2x1x128xf32>
    %10 = vector.shape_cast %9 : vector<2x1x128xf32> to vector<2x128xf32>
    %11 = vector.shape_cast %10 : vector<2x128xf32> to vector<2x1x128xf32>
    %12 = vector.extract_strided_slice %2 {offsets = [0, 0, 0], sizes = [1, 4, 128], strides = [1, 1, 1]} : vector<4x4x128xf32> to vector<1x4x128xf32>
    %13 = vector.shape_cast %12 : vector<1x4x128xf32> to vector<4x128xf32>
    %14 = vector.shape_cast %13 : vector<4x128xf32> to vector<1x4x128xf32>
    %15 = vector.extract_strided_slice %3 {offsets = [0, 0, 0], sizes = [1, 4, 128], strides = [1, 1, 1]} : vector<4x4x128xf32> to vector<1x4x128xf32>
    %16 = vector.shape_cast %15 : vector<1x4x128xf32> to vector<4x128xf32>
    %17 = vector.shape_cast %16 : vector<4x128xf32> to vector<1x4x128xf32>
    %18 = vector.broadcast %8 : vector<2x1x128xf32> to vector<2x4x128xf32>
    %19 = vector.broadcast %14 : vector<1x4x128xf32> to vector<2x4x128xf32>
    %20 = arith.mulf %18, %19 : vector<2x4x128xf32>
    %21 = arith.addf %4, %20 : vector<2x4x128xf32>
    %22 = vector.broadcast %11 : vector<2x1x128xf32> to vector<2x4x128xf32>
    %23 = vector.broadcast %17 : vector<1x4x128xf32> to vector<2x4x128xf32>
    %24 = arith.mulf %22, %23 : vector<2x4x128xf32>
    %25 = arith.subf %21, %24 : vector<2x4x128xf32>
    %26 = vector.broadcast %8 : vector<2x1x128xf32> to vector<2x4x128xf32>
    %27 = vector.broadcast %17 : vector<1x4x128xf32> to vector<2x4x128xf32>
    %28 = arith.mulf %26, %27 : vector<2x4x128xf32>
    %29 = arith.addf %5, %28 : vector<2x4x128xf32>
    %30 = vector.broadcast %11 : vector<2x1x128xf32> to vector<2x4x128xf32>
    %31 = vector.broadcast %14 : vector<1x4x128xf32> to vector<2x4x128xf32>
    %32 = arith.mulf %30, %31 : vector<2x4x128xf32>
    %33 = arith.addf %29, %32 : vector<2x4x128xf32>
    %34 = vector.extract_strided_slice %0 {offsets = [0, 1, 0], sizes = [2, 1, 128], strides = [1, 1, 1]} : vector<2x4x128xf32> to vector<2x1x128xf32>
    %35 = vector.shape_cast %34 : vector<2x1x128xf32> to vector<2x128xf32>
    %36 = vector.shape_cast %35 : vector<2x128xf32> to vector<2x1x128xf32>
    %37 = vector.extract_strided_slice %1 {offsets = [0, 1, 0], sizes = [2, 1, 128], strides = [1, 1, 1]} : vector<2x4x128xf32> to vector<2x1x128xf32>
    %38 = vector.shape_cast %37 : vector<2x1x128xf32> to vector<2x128xf32>
    %39 = vector.shape_cast %38 : vector<2x128xf32> to vector<2x1x128xf32>
    %40 = vector.extract_strided_slice %2 {offsets = [1, 0, 0], sizes = [1, 4, 128], strides = [1, 1, 1]} : vector<4x4x128xf32> to vector<1x4x128xf32>
    %41 = vector.shape_cast %40 : vector<1x4x128xf32> to vector<4x128xf32>
    %42 = vector.shape_cast %41 : vector<4x128xf32> to vector<1x4x128xf32>
    %43 = vector.extract_strided_slice %3 {offsets = [1, 0, 0], sizes = [1, 4, 128], strides = [1, 1, 1]} : vector<4x4x128xf32> to vector<1x4x128xf32>
    %44 = vector.shape_cast %43 : vector<1x4x128xf32> to vector<4x128xf32>
    %45 = vector.shape_cast %44 : vector<4x128xf32> to vector<1x4x128xf32>
    %46 = vector.broadcast %36 : vector<2x1x128xf32> to vector<2x4x128xf32>
    %47 = vector.broadcast %42 : vector<1x4x128xf32> to vector<2x4x128xf32>
    %48 = arith.mulf %46, %47 : vector<2x4x128xf32>
    %49 = arith.addf %25, %48 : vector<2x4x128xf32>
    %50 = vector.broadcast %39 : vector<2x1x128xf32> to vector<2x4x128xf32>
    %51 = vector.broadcast %45 : vector<1x4x128xf32> to vector<2x4x128xf32>
    %52 = arith.mulf %50, %51 : vector<2x4x128xf32>
    %53 = arith.subf %49, %52 : vector<2x4x128xf32>
    %54 = vector.broadcast %36 : vector<2x1x128xf32> to vector<2x4x128xf32>
    %55 = vector.broadcast %45 : vector<1x4x128xf32> to vector<2x4x128xf32>
    %56 = arith.mulf %54, %55 : vector<2x4x128xf32>
    %57 = arith.addf %33, %56 : vector<2x4x128xf32>
    %58 = vector.broadcast %39 : vector<2x1x128xf32> to vector<2x4x128xf32>
    %59 = vector.broadcast %42 : vector<1x4x128xf32> to vector<2x4x128xf32>
    %60 = arith.mulf %58, %59 : vector<2x4x128xf32>
    %61 = arith.addf %57, %60 : vector<2x4x128xf32>
    %62 = vector.extract_strided_slice %0 {offsets = [0, 2, 0], sizes = [2, 1, 128], strides = [1, 1, 1]} : vector<2x4x128xf32> to vector<2x1x128xf32>
    %63 = vector.shape_cast %62 : vector<2x1x128xf32> to vector<2x128xf32>
    %64 = vector.shape_cast %63 : vector<2x128xf32> to vector<2x1x128xf32>
    %65 = vector.extract_strided_slice %1 {offsets = [0, 2, 0], sizes = [2, 1, 128], strides = [1, 1, 1]} : vector<2x4x128xf32> to vector<2x1x128xf32>
    %66 = vector.shape_cast %65 : vector<2x1x128xf32> to vector<2x128xf32>
    %67 = vector.shape_cast %66 : vector<2x128xf32> to vector<2x1x128xf32>
    %68 = vector.extract_strided_slice %2 {offsets = [2, 0, 0], sizes = [1, 4, 128], strides = [1, 1, 1]} : vector<4x4x128xf32> to vector<1x4x128xf32>
    %69 = vector.shape_cast %68 : vector<1x4x128xf32> to vector<4x128xf32>
    %70 = vector.shape_cast %69 : vector<4x128xf32> to vector<1x4x128xf32>
    %71 = vector.extract_strided_slice %3 {offsets = [2, 0, 0], sizes = [1, 4, 128], strides = [1, 1, 1]} : vector<4x4x128xf32> to vector<1x4x128xf32>
    %72 = vector.shape_cast %71 : vector<1x4x128xf32> to vector<4x128xf32>
    %73 = vector.shape_cast %72 : vector<4x128xf32> to vector<1x4x128xf32>
    %74 = vector.broadcast %64 : vector<2x1x128xf32> to vector<2x4x128xf32>
    %75 = vector.broadcast %70 : vector<1x4x128xf32> to vector<2x4x128xf32>
    %76 = arith.mulf %74, %75 : vector<2x4x128xf32>
    %77 = arith.addf %53, %76 : vector<2x4x128xf32>
    %78 = vector.broadcast %67 : vector<2x1x128xf32> to vector<2x4x128xf32>
    %79 = vector.broadcast %73 : vector<1x4x128xf32> to vector<2x4x128xf32>
    %80 = arith.mulf %78, %79 : vector<2x4x128xf32>
    %81 = arith.subf %77, %80 : vector<2x4x128xf32>
    %82 = vector.broadcast %64 : vector<2x1x128xf32> to vector<2x4x128xf32>
    %83 = vector.broadcast %73 : vector<1x4x128xf32> to vector<2x4x128xf32>
    %84 = arith.mulf %82, %83 : vector<2x4x128xf32>
    %85 = arith.addf %61, %84 : vector<2x4x128xf32>
    %86 = vector.broadcast %67 : vector<2x1x128xf32> to vector<2x4x128xf32>
    %87 = vector.broadcast %70 : vector<1x4x128xf32> to vector<2x4x128xf32>
    %88 = arith.mulf %86, %87 : vector<2x4x128xf32>
    %89 = arith.addf %85, %88 : vector<2x4x128xf32>
    %90 = vector.extract_strided_slice %0 {offsets = [0, 3, 0], sizes = [2, 1, 128], strides = [1, 1, 1]} : vector<2x4x128xf32> to vector<2x1x128xf32>
    %91 = vector.shape_cast %90 : vector<2x1x128xf32> to vector<2x128xf32>
    %92 = vector.shape_cast %91 : vector<2x128xf32> to vector<2x1x128xf32>
    %93 = vector.extract_strided_slice %1 {offsets = [0, 3, 0], sizes = [2, 1, 128], strides = [1, 1, 1]} : vector<2x4x128xf32> to vector<2x1x128xf32>
    %94 = vector.shape_cast %93 : vector<2x1x128xf32> to vector<2x128xf32>
    %95 = vector.shape_cast %94 : vector<2x128xf32> to vector<2x1x128xf32>
    %96 = vector.extract_strided_slice %2 {offsets = [3, 0, 0], sizes = [1, 4, 128], strides = [1, 1, 1]} : vector<4x4x128xf32> to vector<1x4x128xf32>
    %97 = vector.shape_cast %96 : vector<1x4x128xf32> to vector<4x128xf32>
    %98 = vector.shape_cast %97 : vector<4x128xf32> to vector<1x4x128xf32>
    %99 = vector.extract_strided_slice %3 {offsets = [3, 0, 0], sizes = [1, 4, 128], strides = [1, 1, 1]} : vector<4x4x128xf32> to vector<1x4x128xf32>
    %100 = vector.shape_cast %99 : vector<1x4x128xf32> to vector<4x128xf32>
    %101 = vector.shape_cast %100 : vector<4x128xf32> to vector<1x4x128xf32>
    %102 = vector.broadcast %92 : vector<2x1x128xf32> to vector<2x4x128xf32>
    %103 = vector.broadcast %98 : vector<1x4x128xf32> to vector<2x4x128xf32>
    %104 = arith.mulf %102, %103 : vector<2x4x128xf32>
    %105 = arith.addf %81, %104 : vector<2x4x128xf32>
    %106 = vector.broadcast %95 : vector<2x1x128xf32> to vector<2x4x128xf32>
    %107 = vector.broadcast %101 : vector<1x4x128xf32> to vector<2x4x128xf32>
    %108 = arith.mulf %106, %107 : vector<2x4x128xf32>
    %109 = arith.subf %105, %108 : vector<2x4x128xf32>
    %110 = vector.broadcast %92 : vector<2x1x128xf32> to vector<2x4x128xf32>
    %111 = vector.broadcast %101 : vector<1x4x128xf32> to vector<2x4x128xf32>
    %112 = arith.mulf %110, %111 : vector<2x4x128xf32>
    %113 = arith.addf %89, %112 : vector<2x4x128xf32>
    %114 = vector.broadcast %95 : vector<2x1x128xf32> to vector<2x4x128xf32>
    %115 = vector.broadcast %98 : vector<1x4x128xf32> to vector<2x4x128xf32>
    %116 = arith.mulf %114, %115 : vector<2x4x128xf32>
    %117 = arith.addf %113, %116 : vector<2x4x128xf32>
    %c0_12 = arith.constant 0 : index
    %c0_13 = arith.constant 0 : index
    %c0_14 = arith.constant 0 : index
    %118 = vector.load %arg5[%c0_12, %c0_13, %c0_14] : memref<2x4x128xf32, #tpu.memory_space<vmem>>, vector<2x4x128xf32>
    tpu.vector_store %arg5[%c0_12, %c0_13, %c0_14], %109 {strides = array<i32>} : memref<2x4x128xf32, #tpu.memory_space<vmem>>, vector<2x4x128xf32>,
    %c0_15 = arith.constant 0 : index
    %c0_16 = arith.constant 0 : index
    %c0_17 = arith.constant 0 : index
    %119 = vector.load %arg6[%c0_15, %c0_16, %c0_17] : memref<2x4x128xf32, #tpu.memory_space<vmem>>, vector<2x4x128xf32>
    tpu.vector_store %arg6[%c0_15, %c0_16, %c0_17], %117 {strides = array<i32>} : memref<2x4x128xf32, #tpu.memory_space<vmem>>, vector<2x4x128xf32>,
    return
  }
  func.func @transform_0(%arg0: i32) -> (i32, i32, i32) {
    %c0_i32 = arith.constant 0 : i32
    %c0_i32_0 = arith.constant 0 : i32
    %c0_i32_1 = arith.constant 0 : i32
    return %c0_i32, %c0_i32_0, %arg0 : i32, i32, i32
  }
  func.func @transform_1(%arg0: i32) -> (i32, i32, i32) {
    %c0_i32 = arith.constant 0 : i32
    %c0_i32_0 = arith.constant 0 : i32
    %c0_i32_1 = arith.constant 0 : i32
    return %c0_i32, %c0_i32_0, %arg0 : i32, i32, i32
  }
  func.func @transform_2(%arg0: i32) -> (i32, i32, i32) {
    %c0_i32 = arith.constant 0 : i32
    %c0_i32_0 = arith.constant 0 : i32
    %c0_i32_1 = arith.constant 0 : i32
    return %c0_i32, %c0_i32_0, %arg0 : i32, i32, i32
  }
  func.func @transform_3(%arg0: i32) -> (i32, i32, i32) {
    %c0_i32 = arith.constant 0 : i32
    %c0_i32_0 = arith.constant 0 : i32
    %c0_i32_1 = arith.constant 0 : i32
    return %c0_i32, %c0_i32_0, %arg0 : i32, i32, i32
  }
  func.func @transform_4(%arg0: i32) -> (i32, i32, i32) {
    %c0_i32 = arith.constant 0 : i32
    %c0_i32_0 = arith.constant 0 : i32
    %c0_i32_1 = arith.constant 0 : i32
    return %c0_i32, %c0_i32_0, %arg0 : i32, i32, i32
  }
  func.func @transform_5(%arg0: i32) -> (i32, i32, i32) {
    %c0_i32 = arith.constant 0 : i32
    %c0_i32_0 = arith.constant 0 : i32
    %c0_i32_1 = arith.constant 0 : i32
    return %c0_i32, %c0_i32_0, %arg0 : i32, i32, i32
  }
}

</mosaic_0001>

<llo_original>
// kernel: custom-call.1
$region0: #{custom-call.1}
  %s0 = inlined_call_operand.hbm [shape: c64[4,4,6,6], index: 0, kind: input, shape index: {}]
  %s1 = inlined_call_operand.vmem [shape: f32[4,4,6,6], index: 1, kind: output, shape index: {}]
  %s2 = scalar_lea.hbm %s0, 96
  $region1: #{custom-call.1} parent=0
    #allocation0 [shape = 's32[1]{0}', space=sflag, size = 0x4, scoped, tag = 'scoped memory for custom-call.1']
    %3 = vsyncpa [#allocation0], 0
    %s5 = sshll.u32 %s2, 4
    %s6 = int_to_ptr.hbm [resolvable:$true] %s5
    %s7 = sshll.u32 %s1, 4
    %s8 = int_to_ptr.vmem [resolvable:$true] %s7
    %10 = dma.hbm_to_vmem [thread:$0]  %s6, 1536, %s8, [#allocation0]
    %12 = dma.done [#allocation0], 1536
    %13 = vsyncpa [#allocation0], 1

// kernel: custom-call
$region0: #{custom-call}
  %s0 = inlined_call_operand.hbm [shape: c64[4,4,6,6], index: 0, kind: input, shape index: {}]
  %s1 = inlined_call_operand.vmem [shape: f32[4,4,6,6], index: 1, kind: output, shape index: {}]
  $region1: #{custom-call} parent=0
    #allocation0 [shape = 's32[1]{0}', space=sflag, size = 0x4, scoped, tag = 'scoped memory for custom-call']
    %2 = vsyncpa [#allocation0], 0
    %s4 = sshll.u32 %s0, 4
    %s5 = int_to_ptr.hbm [resolvable:$true] %s4
    %s6 = sshll.u32 %s1, 4
    %s7 = int_to_ptr.vmem [resolvable:$true] %s6
    %9 = dma.hbm_to_vmem [thread:$0]  %s5, 1536, %s7, [#allocation0]
    %11 = dma.done [#allocation0], 1536
    %12 = vsyncpa [#allocation0], 1

// kernel: reverse.0
$region0: #{reverse.0}
  %s0 = inlined_call_operand.vmem [shape: f32[2,4,16,7], index: 0, kind: input, shape index: {}]
  %s1 = inlined_call_operand.vmem [shape: f32[2,4,16,7], index: 1, kind: output, shape index: {}]
  $region1: #{reverse.0} parent=0
    #allocation0 [shape = 'u8[65536]{0}', space=vmem, size = 0x10000, scoped, tag = 'operand span for operand 0']
    #allocation1 [shape = 'u8[32768]{0}', space=vmem, size = 0x8000, scoped, tag = 'operand span for operand 1']
    %s2 = scalar_lea.vmem [#allocation0], 8
    // Predicated region
    $region2: #{reverse.0} parent=1 // pred_check
      _
    $region3: #{reverse.0} parent=1 // pred_check_branch
      %4 = sbr.rel (0) target = $region5
    $region4: #{reverse.0} parent=1 // pred_region
      // Predicated region
      $region6: #{reverse.0} parent=4 // pred_check
        _
      $region7: #{reverse.0} parent=4 // pred_check_branch
        %6 = sbr.rel (0) target = $region9
      $region8: #{reverse.0} parent=4 // pred_region
        // Predicated region
        $region21: #{reverse.0} parent=8 // pred_check
          _
        $region22: #{reverse.0} parent=8 // pred_check_branch
          %36 = sbr.rel (0) target = $region24
        $region23: #{reverse.0} parent=8 // pred_region
          loop: start=0, step=1, limit=1
          $region25: #{reverse.0} parent=23 // loop_pre_header
            _
          $region26: #{reverse.0} parent=23 // loop_header
            %s38 = sphi 0, %s42
            %p39 = scmp.ge.s32.totalorder %s38, 1
            %s43 = sphi %s0, %s0
            %s44 = sphi %s2, %s2
          $region27: #{reverse.0} parent=23 // loop_header_branch
            %41 = sbr.rel (%p39) target = $region31
          $region28: #{reverse.0} parent=23 // loop_body
            %v45 = vld [vmem:[%s43] sm:$0xff]
            %46 = vst [vmem:[%s44] sm:$0xff] %v45
            %v47 = vld [vmem:[%s43 + $0x8] sm:$0xff]
            %48 = vst [vmem:[%s44 + $0x10] sm:$0xff] %v47
            %v49 = vld [vmem:[%s43 + $0x10] sm:$0xff]
            %50 = vst [vmem:[%s44 + $0x20] sm:$0xff] %v49
            %v51 = vld [vmem:[%s43 + $0x18] sm:$0xff]
            %52 = vst [vmem:[%s44 + $0x30] sm:$0xff] %v51
            %v53 = vld [vmem:[%s43 + $0x20] sm:$0xff]
            %54 = vst [vmem:[%s44 + $0x40] sm:$0xff] %v53
            %v55 = vld [vmem:[%s43 + $0x28] sm:$0xff]
            %56 = vst [vmem:[%s44 + $0x50] sm:$0xff] %v55
            %v57 = vld [vmem:[%s43 + $0x30] sm:$0xff]
            %58 = vst [vmem:[%s44 + $0x60] sm:$0xff] %v57
            %v59 = vld [vmem:[%s43 + $0x38] sm:$0xff]
            %60 = vst [vmem:[%s44 + $0x70] sm:$0xff] %v59
          $region29: #{reverse.0} parent=23 // loop_footer
            %s42 = sadd.s32 1, %s38
          $region30: #{reverse.0} parent=23 // loop_footer_branch
            %37 = sbr.rel target = $region26
          $region31: #{reverse.0} parent=23 // loop_exit
            _
        $region24: #{reverse.0} parent=8 // pred_fallthru
          _
        // Predicated region
        $region32: #{reverse.0} parent=8 // pred_check
          _
        $region33: #{reverse.0} parent=8 // pred_check_branch
          %62 = sbr.rel target = $region35
        $region34: #{reverse.0} parent=8 // pred_region
          _
        $region35: #{reverse.0} parent=8 // pred_fallthru
          _
      $region9: #{reverse.0} parent=4 // pred_fallthru
        _
      // Predicated region
      $region10: #{reverse.0} parent=4 // pred_check
        _
      $region11: #{reverse.0} parent=4 // pred_check_branch
        %8 = sbr.rel target = $region13
      $region12: #{reverse.0} parent=4 // pred_region
        %s10 = ssub.s32 256, 1
        loop: start=0, step=1, limit=1
        $region14: #{reverse.0} parent=12 // loop_pre_header
          _
        $region15: #{reverse.0} parent=12 // loop_header
          %s12 = sphi 0, %s16
          %p13 = scmp.ge.s32.totalorder %s12, 1
          %s17 = sphi %s0, %s0
          %s18 = sphi %s2, %s2
        $region16: #{reverse.0} parent=12 // loop_header_branch
          %15 = sbr.rel (%p13) target = $region20
        $region17: #{reverse.0} parent=12 // loop_body
          %v19 = vld [vmem:[%s17] sm:%s10]
          %20 = vst [vmem:[%s18] sm:%s10] %v19
          %v21 = vld [vmem:[%s17 + $0x8] sm:%s10]
          %22 = vst [vmem:[%s18 + $0x10] sm:%s10] %v21
          %v23 = vld [vmem:[%s17 + $0x10] sm:%s10]
          %24 = vst [vmem:[%s18 + $0x20] sm:%s10] %v23
          %v25 = vld [vmem:[%s17 + $0x18] sm:%s10]
          %26 = vst [vmem:[%s18 + $0x30] sm:%s10] %v25
          %v27 = vld [vmem:[%s17 + $0x20] sm:%s10]
          %28 = vst [vmem:[%s18 + $0x40] sm:%s10] %v27
          %v29 = vld [vmem:[%s17 + $0x28] sm:%s10]
          %30 = vst [vmem:[%s18 + $0x50] sm:%s10] %v29
          %v31 = vld [vmem:[%s17 + $0x30] sm:%s10]
          %32 = vst [vmem:[%s18 + $0x60] sm:%s10] %v31
          %v33 = vld [vmem:[%s17 + $0x38] sm:%s10]
          %34 = vst [vmem:[%s18 + $0x70] sm:%s10] %v33
        $region18: #{reverse.0} parent=12 // loop_footer
          %s16 = sadd.s32 1, %s12
        $region19: #{reverse.0} parent=12 // loop_footer_branch
          %11 = sbr.rel target = $region15
        $region20: #{reverse.0} parent=12 // loop_exit
          _
      $region13: #{reverse.0} parent=4 // pred_fallthru
        _
    $region5: #{reverse.0} parent=1 // pred_fallthru
      _
    %63 = vnop
    %s64 = scalar_lea.vmem [#allocation0], 7
    %v65 = vld [vmem:[%s64] ss:$-1 sm:$0xff]
    %v66 = vrot.slane %v65, 1
    %67 = vst [vmem:[#allocation1] sm:$0xff] %v66
    %s68 = scalar_lea.vmem [#allocation0], 8
    %s69 = scalar_lea.vmem %s68, 7 [#allocation0]
    %v70 = vld [vmem:[%s69] ss:$-1 sm:$0xff]
    %v71 = vrot.slane %v70, 1
    %v72 = vlaneseq
    %v73 = vshrl.u32 %v72, 7
    %vm74 = vcmp.lt.s32.totalorder %v73, 7
    %75 = vst.msk [vmem:[#allocation1] sm:$0xff] %vm74, %v71
    %s76 = scalar_lea.vmem [#allocation1], 8
    %s77 = scalar_lea.vmem [#allocation0], 16
    %s78 = scalar_lea.vmem %s77, 7 [#allocation0]
    %v79 = vld [vmem:[%s78] ss:$-1 sm:$0xff]
    %v80 = vrot.slane %v79, 1
    %81 = vst [vmem:[%s76] sm:$0xff] %v80
    %s82 = scalar_lea.vmem %s77, 8 [#allocation0]
    %s83 = scalar_lea.vmem %s82, 7 [#allocation0]
    %v84 = vld [vmem:[%s83] ss:$-1 sm:$0xff]
    %v85 = vrot.slane %v84, 1
    %v86 = vlaneseq
    %v87 = vshrl.u32 %v86, 7
    %vm88 = vcmp.lt.s32.totalorder %v87, 7
    %89 = vst.msk [vmem:[%s76] sm:$0xff] %vm88, %v85
    %s90 = scalar_lea.vmem [#allocation1], 16
    %s91 = scalar_lea.vmem [#allocation0], 32
    %s92 = scalar_lea.vmem %s91, 7 [#allocation0]
    %v93 = vld [vmem:[%s92] ss:$-1 sm:$0xff]
    %v94 = vrot.slane %v93, 1
    %95 = vst [vmem:[%s90] sm:$0xff] %v94
    %s96 = scalar_lea.vmem %s91, 8 [#allocation0]
    %s97 = scalar_lea.vmem %s96, 7 [#allocation0]
    %v98 = vld [vmem:[%s97] ss:$-1 sm:$0xff]
    %v99 = vrot.slane %v98, 1
    %v100 = vlaneseq
    %v101 = vshrl.u32 %v100, 7
    %vm102 = vcmp.lt.s32.totalorder %v101, 7
    %103 = vst.msk [vmem:[%s90] sm:$0xff] %vm102, %v99
    %s104 = scalar_lea.vmem [#allocation1], 24
    %s105 = scalar_lea.vmem [#allocation0], 48
    %s106 = scalar_lea.vmem %s105, 7 [#allocation0]
    %v107 = vld [vmem:[%s106] ss:$-1 sm:$0xff]
    %v108 = vrot.slane %v107, 1
    %109 = vst [vmem:[%s104] sm:$0xff] %v108
    %s110 = scalar_lea.vmem %s105, 8 [#allocation0]
    %s111 = scalar_lea.vmem %s110, 7 [#allocation0]
    %v112 = vld [vmem:[%s111] ss:$-1 sm:$0xff]
    %v113 = vrot.slane %v112, 1
    %v114 = vlaneseq
    %v115 = vshrl.u32 %v114, 7
    %vm116 = vcmp.lt.s32.totalorder %v115, 7
    %117 = vst.msk [vmem:[%s104] sm:$0xff] %vm116, %v113
    %s118 = scalar_lea.vmem [#allocation1], 32
    %s119 = scalar_lea.vmem [#allocation0], 64
    %s120 = scalar_lea.vmem %s119, 7 [#allocation0]
    %v121 = vld [vmem:[%s120] ss:$-1 sm:$0xff]
    %v122 = vrot.slane %v121, 1
    %123 = vst [vmem:[%s118] sm:$0xff] %v122
    %s124 = scalar_lea.vmem %s119, 8 [#allocation0]
    %s125 = scalar_lea.vmem %s124, 7 [#allocation0]
    %v126 = vld [vmem:[%s125] ss:$-1 sm:$0xff]
    %v127 = vrot.slane %v126, 1
    %v128 = vlaneseq
    %v129 = vshrl.u32 %v128, 7
    %vm130 = vcmp.lt.s32.totalorder %v129, 7
    %131 = vst.msk [vmem:[%s118] sm:$0xff] %vm130, %v127
    %s132 = scalar_lea.vmem [#allocation1], 40
    %s133 = scalar_lea.vmem [#allocation0], 80
    %s134 = scalar_lea.vmem %s133, 7 [#allocation0]
    %v135 = vld [vmem:[%s134] ss:$-1 sm:$0xff]
    %v136 = vrot.slane %v135, 1
    %137 = vst [vmem:[%s132] sm:$0xff] %v136
    %s138 = scalar_lea.vmem %s133, 8 [#allocation0]
    %s139 = scalar_lea.vmem %s138, 7 [#allocation0]
    %v140 = vld [vmem:[%s139] ss:$-1 sm:$0xff]
    %v141 = vrot.slane %v140, 1
    %v142 = vlaneseq
    %v143 = vshrl.u32 %v142, 7
    %vm144 = vcmp.lt.s32.totalorder %v143, 7
    %145 = vst.msk [vmem:[%s132] sm:$0xff] %vm144, %v141
    %s146 = scalar_lea.vmem [#allocation1], 48
    %s147 = scalar_lea.vmem [#allocation0], 96
    %s148 = scalar_lea.vmem %s147, 7 [#allocation0]
    %v149 = vld [vmem:[%s148] ss:$-1 sm:$0xff]
    %v150 = vrot.slane %v149, 1
    %151 = vst [vmem:[%s146] sm:$0xff] %v150
    %s152 = scalar_lea.vmem %s147, 8 [#allocation0]
    %s153 = scalar_lea.vmem %s152, 7 [#allocation0]
    %v154 = vld [vmem:[%s153] ss:$-1 sm:$0xff]
    %v155 = vrot.slane %v154, 1
    %v156 = vlaneseq
    %v157 = vshrl.u32 %v156, 7
    %vm158 = vcmp.lt.s32.totalorder %v157, 7
    %159 = vst.msk [vmem:[%s146] sm:$0xff] %vm158, %v155
    %s160 = scalar_lea.vmem [#allocation1], 56
    %s161 = scalar_lea.vmem [#allocation0], 112
    %s162 = scalar_lea.vmem %s161, 7 [#allocation0]
    %v163 = vld [vmem:[%s162] ss:$-1 sm:$0xff]
    %v164 = vrot.slane %v163, 1
    %165 = vst [vmem:[%s160] sm:$0xff] %v164
    %s166 = scalar_lea.vmem %s161, 8 [#allocation0]
    %s167 = scalar_lea.vmem %s166, 7 [#allocation0]
    %v168 = vld [vmem:[%s167] ss:$-1 sm:$0xff]
    %v169 = vrot.slane %v168, 1
    %v170 = vlaneseq
    %v171 = vshrl.u32 %v170, 7
    %vm172 = vcmp.lt.s32.totalorder %v171, 7
    %173 = vst.msk [vmem:[%s160] sm:$0xff] %vm172, %v169
    // Predicated region
    $region36: #{reverse.0} parent=1 // pred_check
      _
    $region37: #{reverse.0} parent=1 // pred_check_branch
      %175 = sbr.rel (0) target = $region39
    $region38: #{reverse.0} parent=1 // pred_region
      // Predicated region
      $region40: #{reverse.0} parent=38 // pred_check
        _
      $region41: #{reverse.0} parent=38 // pred_check_branch
        %177 = sbr.rel (0) target = $region43
      $region42: #{reverse.0} parent=38 // pred_region
        // Predicated region
        $region55: #{reverse.0} parent=42 // pred_check
          _
        $region56: #{reverse.0} parent=42 // pred_check_branch
          %207 = sbr.rel (0) target = $region58
        $region57: #{reverse.0} parent=42 // pred_region
          loop: start=0, step=1, limit=1
          $region59: #{reverse.0} parent=57 // loop_pre_header
            _
          $region60: #{reverse.0} parent=57 // loop_header
            %s209 = sphi 0, %s213
            %p210 = scmp.ge.s32.totalorder %s209, 1
            %s214 = sphi [#allocation1], [#allocation1]
            %s215 = sphi %s1, %s1
          $region61: #{reverse.0} parent=57 // loop_header_branch
            %212 = sbr.rel (%p210) target = $region65
          $region62: #{reverse.0} parent=57 // loop_body
            %v216 = vld [vmem:[%s214] sm:$0xff]
            %217 = vst [vmem:[%s215] sm:$0xff] %v216
            %v218 = vld [vmem:[%s214 + $0x8] sm:$0xff]
            %219 = vst [vmem:[%s215 + $0x8] sm:$0xff] %v218
            %v220 = vld [vmem:[%s214 + $0x10] sm:$0xff]
            %221 = vst [vmem:[%s215 + $0x10] sm:$0xff] %v220
            %v222 = vld [vmem:[%s214 + $0x18] sm:$0xff]
            %223 = vst [vmem:[%s215 + $0x18] sm:$0xff] %v222
            %v224 = vld [vmem:[%s214 + $0x20] sm:$0xff]
            %225 = vst [vmem:[%s215 + $0x20] sm:$0xff] %v224
            %v226 = vld [vmem:[%s214 + $0x28] sm:$0xff]
            %227 = vst [vmem:[%s215 + $0x28] sm:$0xff] %v226
            %v228 = vld [vmem:[%s214 + $0x30] sm:$0xff]
            %229 = vst [vmem:[%s215 + $0x30] sm:$0xff] %v228
            %v230 = vld [vmem:[%s214 + $0x38] sm:$0xff]
            %231 = vst [vmem:[%s215 + $0x38] sm:$0xff] %v230
          $region63: #{reverse.0} parent=57 // loop_footer
            %s213 = sadd.s32 1, %s209
          $region64: #{reverse.0} parent=57 // loop_footer_branch
            %208 = sbr.rel target = $region60
          $region65: #{reverse.0} parent=57 // loop_exit
            _
        $region58: #{reverse.0} parent=42 // pred_fallthru
          _
        // Predicated region
        $region66: #{reverse.0} parent=42 // pred_check
          _
        $region67: #{reverse.0} parent=42 // pred_check_branch
          %233 = sbr.rel target = $region69
        $region68: #{reverse.0} parent=42 // pred_region
          _
        $region69: #{reverse.0} parent=42 // pred_fallthru
          _
      $region43: #{reverse.0} parent=38 // pred_fallthru
        _
      // Predicated region
      $region44: #{reverse.0} parent=38 // pred_check
        _
      $region45: #{reverse.0} parent=38 // pred_check_branch
        %179 = sbr.rel target = $region47
      $region46: #{reverse.0} parent=38 // pred_region
        %s181 = ssub.s32 256, 1
        loop: start=0, step=1, limit=1
        $region48: #{reverse.0} parent=46 // loop_pre_header
          _
        $region49: #{reverse.0} parent=46 // loop_header
          %s183 = sphi 0, %s187
          %p184 = scmp.ge.s32.totalorder %s183, 1
          %s188 = sphi [#allocation1], [#allocation1]
          %s189 = sphi %s1, %s1
        $region50: #{reverse.0} parent=46 // loop_header_branch
          %186 = sbr.rel (%p184) target = $region54
        $region51: #{reverse.0} parent=46 // loop_body
          %v190 = vld [vmem:[%s188] sm:%s181]
          %191 = vst [vmem:[%s189] sm:%s181] %v190
          %v192 = vld [vmem:[%s188 + $0x8] sm:%s181]
          %193 = vst [vmem:[%s189 + $0x8] sm:%s181] %v192
          %v194 = vld [vmem:[%s188 + $0x10] sm:%s181]
          %195 = vst [vmem:[%s189 + $0x10] sm:%s181] %v194
          %v196 = vld [vmem:[%s188 + $0x18] sm:%s181]
          %197 = vst [vmem:[%s189 + $0x18] sm:%s181] %v196
          %v198 = vld [vmem:[%s188 + $0x20] sm:%s181]
          %199 = vst [vmem:[%s189 + $0x20] sm:%s181] %v198
          %v200 = vld [vmem:[%s188 + $0x28] sm:%s181]
          %201 = vst [vmem:[%s189 + $0x28] sm:%s181] %v200
          %v202 = vld [vmem:[%s188 + $0x30] sm:%s181]
          %203 = vst [vmem:[%s189 + $0x30] sm:%s181] %v202
          %v204 = vld [vmem:[%s188 + $0x38] sm:%s181]
          %205 = vst [vmem:[%s189 + $0x38] sm:%s181] %v204
        $region52: #{reverse.0} parent=46 // loop_footer
          %s187 = sadd.s32 1, %s183
        $region53: #{reverse.0} parent=46 // loop_footer_branch
          %182 = sbr.rel target = $region49
        $region54: #{reverse.0} parent=46 // loop_exit
          _
      $region47: #{reverse.0} parent=38 // pred_fallthru
        _
    $region39: #{reverse.0} parent=1 // pred_fallthru
      _
    %234 = vnop

// kernel: spectral_conv2d.1
$region0: #{spectral_conv2d.1}
  #allocation0 [shape = 'u32[]', space=smem, size = 0x4, offset = 0x4, fixed_abs, tag = 'smem constant byte address 0x4 - core index']
  #allocation1 [shape = 'u32[72,128]{1,0:T(1,128)}', space=vmem, size = 0x9000, scoped, tag = 'internal scratch']
  %s0 = inlined_call_operand.vmem [shape: f32[2,4,256], index: 0, kind: input, shape index: {}]
  %s1 = inlined_call_operand.vmem [shape: f32[2,4,256], index: 1, kind: input, shape index: {}]
  %s2 = inlined_call_operand.vmem [shape: f32[4,4,256], index: 2, kind: input, shape index: {}]
  %s3 = inlined_call_operand.vmem [shape: f32[4,4,256], index: 3, kind: input, shape index: {}]
  %s4 = inlined_call_operand.vmem [shape: f32[2,4,256], index: 4, kind: output, shape index: {0}]
  %s5 = inlined_call_operand.vmem [shape: f32[2,4,256], index: 5, kind: output, shape index: {1}]
  %6 = xla_tuple %s4, %s5
  %s7 = sld [smem:[#allocation0]]
  $region295: #{spectral_conv2d.1} parent=0
    _
  %s9 = ssub.s32 1, %s7
  %s10 = scalar_select 0, %s9, %s7
  $region1: #{spectral_conv2d.1} parent=0
    #allocation2 [shape = 'u8[8192]{0}', space=vmem, size = 0x2000, scoped, tag = 'input window, operand 0']
    #allocation3 [shape = 'u8[8192]{0}', space=vmem, size = 0x2000, scoped, tag = 'input window, operand 1']
    #allocation4 [shape = 'u8[16384]{0}', space=vmem, size = 0x4000, scoped, tag = 'input window, operand 2']
    #allocation5 [shape = 'u8[16384]{0}', space=vmem, size = 0x4000, scoped, tag = 'input window, operand 3']
    #allocation6 [shape = 'u8[8192]{0}', space=vmem, size = 0x2000, scoped, tag = 'output window, operand 0']
    #allocation7 [shape = 'u8[8192]{0}', space=vmem, size = 0x2000, scoped, tag = 'output window, operand 1']
    loop: start=0, step=1, limit=4
    $region2: #{spectral_conv2d.1} parent=1 // loop_pre_header
      _
    $region3: #{spectral_conv2d.1} parent=1 // loop_header
      %s12 = sphi 0, %s16
      %p13 = scmp.ge.s32.totalorder %s12, 4
      %s22 = sphi 0, %s24
      %s25 = sphi 0, %s22
      %s26 = sphi 0, %s25
      %s42 = sphi 0, %s26
      %s48 = sphi 0, %s50
      %s51 = sphi 0, %s48
      %s52 = sphi 0, %s51
      %s68 = sphi 0, %s52
      %s74 = sphi 0, %s76
      %s77 = sphi 0, %s74
      %s78 = sphi 0, %s77
      %s94 = sphi 0, %s78
      %s100 = sphi 0, %s102
      %s103 = sphi 0, %s100
      %s104 = sphi 0, %s103
      %s120 = sphi 0, %s104
      %s126 = sphi 0, %s128
      %s129 = sphi 0, %s126
      %s130 = sphi 0, %s129
      %s146 = sphi 0, %s130
      %s152 = sphi 0, %s154
      %s155 = sphi 0, %s152
      %s156 = sphi 0, %s155
      %s172 = sphi 0, %s156
    $region4: #{spectral_conv2d.1} parent=1 // loop_header_branch
      %15 = sbr.rel (%p13) target = $region8
    $region5: #{spectral_conv2d.1} parent=1 // loop_body
      %s17 = ssub.s32 %s12, 1
      %s18 = ssub.s32 %s12, 2
      %s19 = sadd.s32 %s12, 1
      %s20 = ssub.s32 %s12, %s19
      %p21 = scmp.eq.s32.totalorder %s20, 0
      %s23 = sadd.s32 %s22, 1
      %s24 = scalar_select %p21, %s22, %s23
      %p27 = pneg %p21
      %p28 = scmp.eq.s32.totalorder %s12, 1
      %p29 = por %p27, %p28
      %p30 = scmp.ne.s32.totalorder %s22, %s25
      %p31 = scmp.eq.s32.totalorder %s12, 0
      %p32 = por %p30, %p31
      %p33 = scmp.ne.s32.totalorder %s22, %s25
      %p34 = scmp.eq.s32.totalorder %s17, 1
      %p35 = por %p33, %p34
      %p36 = scmp.ne.s32.totalorder %s25, %s26
      %p37 = scmp.eq.s32.totalorder %s17, 0
      %p38 = por %p36, %p37
      %p39 = scmp.ne.s32.totalorder %s25, %s26
      %p40 = scmp.eq.s32.totalorder %s18, 1
      %p41 = por %p39, %p40
      %p43 = scmp.ne.s32.totalorder %s26, %s42
      %p44 = scmp.eq.s32.totalorder %s18, 0
      %p45 = por %p43, %p44
      %s46 = ssub.s32 %s12, %s19
      %p47 = scmp.eq.s32.totalorder %s46, 0
      %s49 = sadd.s32 %s48, 1
      %s50 = scalar_select %p47, %s48, %s49
      %p53 = pneg %p47
      %p54 = scmp.eq.s32.totalorder %s12, 1
      %p55 = por %p53, %p54
      %p56 = scmp.ne.s32.totalorder %s48, %s51
      %p57 = scmp.eq.s32.totalorder %s12, 0
      %p58 = por %p56, %p57
      %p59 = scmp.ne.s32.totalorder %s48, %s51
      %p60 = scmp.eq.s32.totalorder %s17, 1
      %p61 = por %p59, %p60
      %p62 = scmp.ne.s32.totalorder %s51, %s52
      %p63 = scmp.eq.s32.totalorder %s17, 0
      %p64 = por %p62, %p63
      %p65 = scmp.ne.s32.totalorder %s51, %s52
      %p66 = scmp.eq.s32.totalorder %s18, 1
      %p67 = por %p65, %p66
      %p69 = scmp.ne.s32.totalorder %s52, %s68
      %p70 = scmp.eq.s32.totalorder %s18, 0
      %p71 = por %p69, %p70
      %s72 = ssub.s32 %s12, %s19
      %p73 = scmp.eq.s32.totalorder %s72, 0
      %s75 = sadd.s32 %s74, 1
      %s76 = scalar_select %p73, %s74, %s75
      %p79 = pneg %p73
      %p80 = scmp.eq.s32.totalorder %s12, 1
      %p81 = por %p79, %p80
      %p82 = scmp.ne.s32.totalorder %s74, %s77
      %p83 = scmp.eq.s32.totalorder %s12, 0
      %p84 = por %p82, %p83
      %p85 = scmp.ne.s32.totalorder %s74, %s77
      %p86 = scmp.eq.s32.totalorder %s17, 1
      %p87 = por %p85, %p86
      %p88 = scmp.ne.s32.totalorder %s77, %s78
      %p89 = scmp.eq.s32.totalorder %s17, 0
      %p90 = por %p88, %p89
      %p91 = scmp.ne.s32.totalorder %s77, %s78
      %p92 = scmp.eq.s32.totalorder %s18, 1
      %p93 = por %p91, %p92
      %p95 = scmp.ne.s32.totalorder %s78, %s94
      %p96 = scmp.eq.s32.totalorder %s18, 0
      %p97 = por %p95, %p96
      %s98 = ssub.s32 %s12, %s19
      %p99 = scmp.eq.s32.totalorder %s98, 0
      %s101 = sadd.s32 %s100, 1
      %s102 = scalar_select %p99, %s100, %s101
      %p105 = pneg %p99
      %p106 = scmp.eq.s32.totalorder %s12, 1
      %p107 = por %p105, %p106
      %p108 = scmp.ne.s32.totalorder %s100, %s103
      %p109 = scmp.eq.s32.totalorder %s12, 0
      %p110 = por %p108, %p109
      %p111 = scmp.ne.s32.totalorder %s100, %s103
      %p112 = scmp.eq.s32.totalorder %s17, 1
      %p113 = por %p111, %p112
      %p114 = scmp.ne.s32.totalorder %s103, %s104
      %p115 = scmp.eq.s32.totalorder %s17, 0
      %p116 = por %p114, %p115
      %p117 = scmp.ne.s32.totalorder %s103, %s104
      %p118 = scmp.eq.s32.totalorder %s18, 1
      %p119 = por %p117, %p118
      %p121 = scmp.ne.s32.totalorder %s104, %s120
      %p122 = scmp.eq.s32.totalorder %s18, 0
      %p123 = por %p121, %p122
      %s124 = ssub.s32 %s12, %s19
      %p125 = scmp.eq.s32.totalorder %s124, 0
      %s127 = sadd.s32 %s126, 1
      %s128 = scalar_select %p125, %s126, %s127
      %p131 = pneg %p125
      %p132 = scmp.eq.s32.totalorder %s12, 1
      %p133 = por %p131, %p132
      %p134 = scmp.ne.s32.totalorder %s126, %s129
      %p135 = scmp.eq.s32.totalorder %s12, 0
      %p136 = por %p134, %p135
      %p137 = scmp.ne.s32.totalorder %s126, %s129
      %p138 = scmp.eq.s32.totalorder %s17, 1
      %p139 = por %p137, %p138
      %p140 = scmp.ne.s32.totalorder %s129, %s130
      %p141 = scmp.eq.s32.totalorder %s17, 0
      %p142 = por %p140, %p141
      %p143 = scmp.ne.s32.totalorder %s129, %s130
      %p144 = scmp.eq.s32.totalorder %s18, 1
      %p145 = por %p143, %p144
      %p147 = scmp.ne.s32.totalorder %s130, %s146
      %p148 = scmp.eq.s32.totalorder %s18, 0
      %p149 = por %p147, %p148
      %s150 = ssub.s32 %s12, %s19
      %p151 = scmp.eq.s32.totalorder %s150, 0
      %s153 = sadd.s32 %s152, 1
      %s154 = scalar_select %p151, %s152, %s153
      %p157 = pneg %p151
      %p158 = scmp.eq.s32.totalorder %s12, 1
      %p159 = por %p157, %p158
      %p160 = scmp.ne.s32.totalorder %s152, %s155
      %p161 = scmp.eq.s32.totalorder %s12, 0
      %p162 = por %p160, %p161
      %p163 = scmp.ne.s32.totalorder %s152, %s155
      %p164 = scmp.eq.s32.totalorder %s17, 1
      %p165 = por %p163, %p164
      %p166 = scmp.ne.s32.totalorder %s155, %s156
      %p167 = scmp.eq.s32.totalorder %s17, 0
      %p168 = por %p166, %p167
      %p169 = scmp.ne.s32.totalorder %s155, %s156
      %p170 = scmp.eq.s32.totalorder %s18, 1
      %p171 = por %p169, %p170
      %p173 = scmp.ne.s32.totalorder %s156, %s172
      %p174 = scmp.eq.s32.totalorder %s18, 0
      %p175 = por %p173, %p174
      %p176 = scmp.le.s32.totalorder 1, %s12
      %p177 = scmp.lt.s32.totalorder %s12, 3
      %p178 = pnand %p176, %p177
      %p179 = pneg %p178
      // Predicated region
      $region9: #{spectral_conv2d.1} parent=5 // pred_check
        _
      $region10: #{spectral_conv2d.1} parent=5 // pred_check_branch
        %181 = sbr.rel (%p178) target = $region12
      $region11: #{spectral_conv2d.1} parent=5 // pred_region
        %s182 = ssub.s32 %s12, 1
      $region12: #{spectral_conv2d.1} parent=5 // pred_fallthru
        _
      %p183 = scmp.lt.s32.totalorder %s12, 2
      // Predicated region
      $region13: #{spectral_conv2d.1} parent=5 // pred_check
        %p184 = pneg %p183
      $region14: #{spectral_conv2d.1} parent=5 // pred_check_branch
        %186 = sbr.rel (%p184) target = $region16
      $region15: #{spectral_conv2d.1} parent=5 // pred_region
        // Predicated region
        $region17: #{spectral_conv2d.1} parent=15 // pred_check
          %p187 = pneg %p32
        $region18: #{spectral_conv2d.1} parent=15 // pred_check_branch
          %189 = sbr.rel (%p187) target = $region20
        $region19: #{spectral_conv2d.1} parent=15 // pred_region
          %s190 = sand.u32 %s22, 1
          %s191 = sand.u32 %s22, 1
          %s192 = smul.addr %s191, 8
          %s193 = scalar_lea.vmem [#allocation2], %s192
          %s194 = smul.addr %s12, 4
          %s195 = scalar_lea.vmem %s0, %s194
          // Predicated region
          $region21: #{spectral_conv2d.1} parent=19 // pred_check
            _
          $region22: #{spectral_conv2d.1} parent=19 // pred_check_branch
            %197 = sbr.rel (0) target = $region24
          $region23: #{spectral_conv2d.1} parent=19 // pred_region
            // Predicated region
            $region25: #{spectral_conv2d.1} parent=23 // pred_check
              _
            $region26: #{spectral_conv2d.1} parent=23 // pred_check_branch
              %199 = sbr.rel target = $region28
            $region27: #{spectral_conv2d.1} parent=23 // pred_region
              // Predicated region
              $region40: #{spectral_conv2d.1} parent=27 // pred_check
                _
              $region41: #{spectral_conv2d.1} parent=27 // pred_check_branch
                %217 = sbr.rel (0) target = $region43
              $region42: #{spectral_conv2d.1} parent=27 // pred_region
                loop: start=0, step=1, limit=1
                $region44: #{spectral_conv2d.1} parent=42 // loop_pre_header
                  _
                $region45: #{spectral_conv2d.1} parent=42 // loop_header
                  %s219 = sphi 0, %s223
                  %p220 = scmp.ge.s32.totalorder %s219, 1
                  %s224 = sphi %s195, %s195
                  %s225 = sphi %s193, %s193
                $region46: #{spectral_conv2d.1} parent=42 // loop_header_branch
                  %222 = sbr.rel (%p220) target = $region50
                $region47: #{spectral_conv2d.1} parent=42 // loop_body
                  _
                $region48: #{spectral_conv2d.1} parent=42 // loop_footer
                  %s223 = sadd.s32 1, %s219
                $region49: #{spectral_conv2d.1} parent=42 // loop_footer_branch
                  %218 = sbr.rel target = $region45
                $region50: #{spectral_conv2d.1} parent=42 // loop_exit
                  _
                %s227 = ssub.s32 16, 1
                loop: start=0, step=1, limit=1
                $region51: #{spectral_conv2d.1} parent=42 // loop_pre_header
                  _
                $region52: #{spectral_conv2d.1} parent=42 // loop_header
                  %s229 = sphi 0, %s233
                  %p230 = scmp.ge.s32.totalorder %s229, 1
                  %s234 = sphi %s195, %s195
                  %s235 = sphi %s193, %s193
                $region53: #{spectral_conv2d.1} parent=42 // loop_header_branch
                  %232 = sbr.rel (%p230) target = $region57
                $region54: #{spectral_conv2d.1} parent=42 // loop_body
                  %v236 = vld [vmem:[%s234] sm:%s227]
                  %237 = vst [vmem:[%s235] sm:%s227] %v236
                  %v238 = vld [vmem:[%s234 + $0x8] sm:%s227]
                  %239 = vst [vmem:[%s235 + $0x4] sm:%s227] %v238
                $region55: #{spectral_conv2d.1} parent=42 // loop_footer
                  %s233 = sadd.s32 1, %s229
                $region56: #{spectral_conv2d.1} parent=42 // loop_footer_branch
                  %228 = sbr.rel target = $region52
                $region57: #{spectral_conv2d.1} parent=42 // loop_exit
                  _
              $region43: #{spectral_conv2d.1} parent=27 // pred_fallthru
                _
            $region28: #{spectral_conv2d.1} parent=23 // pred_fallthru
              _
            // Predicated region
            $region29: #{spectral_conv2d.1} parent=23 // pred_check
              _
            $region30: #{spectral_conv2d.1} parent=23 // pred_check_branch
              %201 = sbr.rel (0) target = $region32
            $region31: #{spectral_conv2d.1} parent=23 // pred_region
              %s203 = ssub.s32 16, 1
              loop: start=0, step=1, limit=1
              $region33: #{spectral_conv2d.1} parent=31 // loop_pre_header
                _
              $region34: #{spectral_conv2d.1} parent=31 // loop_header
                %s205 = sphi 0, %s209
                %p206 = scmp.ge.s32.totalorder %s205, 1
                %s210 = sphi %s195, %s195
                %s211 = sphi %s193, %s193
              $region35: #{spectral_conv2d.1} parent=31 // loop_header_branch
                %208 = sbr.rel (%p206) target = $region39
              $region36: #{spectral_conv2d.1} parent=31 // loop_body
                %v212 = vld [vmem:[%s210] sm:%s203]
                %213 = vst [vmem:[%s211] sm:%s203] %v212
                %v214 = vld [vmem:[%s210 + $0x8] sm:%s203]
                %215 = vst [vmem:[%s211 + $0x4] sm:%s203] %v214
              $region37: #{spectral_conv2d.1} parent=31 // loop_footer
                %s209 = sadd.s32 1, %s205
              $region38: #{spectral_conv2d.1} parent=31 // loop_footer_branch
                %204 = sbr.rel target = $region34
              $region39: #{spectral_conv2d.1} parent=31 // loop_exit
                _
            $region32: #{spectral_conv2d.1} parent=23 // pred_fallthru
              _
          $region24: #{spectral_conv2d.1} parent=19 // pred_fallthru
            _
          %240 = vnop
        $region20: #{spectral_conv2d.1} parent=15 // pred_fallthru
          _
        // Predicated region
        $region58: #{spectral_conv2d.1} parent=15 // pred_check
          %p241 = pneg %p58
        $region59: #{spectral_conv2d.1} parent=15 // pred_check_branch
          %243 = sbr.rel (%p241) target = $region61
        $region60: #{spectral_conv2d.1} parent=15 // pred_region
          %s244 = sand.u32 %s48, 1
          %s245 = sand.u32 %s48, 1
          %s246 = smul.addr %s245, 8
          %s247 = scalar_lea.vmem [#allocation3], %s246
          %s248 = smul.addr %s12, 4
          %s249 = scalar_lea.vmem %s1, %s248
          // Predicated region
          $region62: #{spectral_conv2d.1} parent=60 // pred_check
            _
          $region63: #{spectral_conv2d.1} parent=60 // pred_check_branch
            %251 = sbr.rel (0) target = $region65
          $region64: #{spectral_conv2d.1} parent=60 // pred_region
            // Predicated region
            $region66: #{spectral_conv2d.1} parent=64 // pred_check
              _
            $region67: #{spectral_conv2d.1} parent=64 // pred_check_branch
              %253 = sbr.rel target = $region69
            $region68: #{spectral_conv2d.1} parent=64 // pred_region
              // Predicated region
              $region81: #{spectral_conv2d.1} parent=68 // pred_check
                _
              $region82: #{spectral_conv2d.1} parent=68 // pred_check_branch
                %271 = sbr.rel (0) target = $region84
              $region83: #{spectral_conv2d.1} parent=68 // pred_region
                loop: start=0, step=1, limit=1
                $region85: #{spectral_conv2d.1} parent=83 // loop_pre_header
                  _
                $region86: #{spectral_conv2d.1} parent=83 // loop_header
                  %s273 = sphi 0, %s277
                  %p274 = scmp.ge.s32.totalorder %s273, 1
                  %s278 = sphi %s249, %s249
                  %s279 = sphi %s247, %s247
                $region87: #{spectral_conv2d.1} parent=83 // loop_header_branch
                  %276 = sbr.rel (%p274) target = $region91
                $region88: #{spectral_conv2d.1} parent=83 // loop_body
                  _
                $region89: #{spectral_conv2d.1} parent=83 // loop_footer
                  %s277 = sadd.s32 1, %s273
                $region90: #{spectral_conv2d.1} parent=83 // loop_footer_branch
                  %272 = sbr.rel target = $region86
                $region91: #{spectral_conv2d.1} parent=83 // loop_exit
                  _
                %s281 = ssub.s32 16, 1
                loop: start=0, step=1, limit=1
                $region92: #{spectral_conv2d.1} parent=83 // loop_pre_header
                  _
                $region93: #{spectral_conv2d.1} parent=83 // loop_header
                  %s283 = sphi 0, %s287
                  %p284 = scmp.ge.s32.totalorder %s283, 1
                  %s288 = sphi %s249, %s249
                  %s289 = sphi %s247, %s247
                $region94: #{spectral_conv2d.1} parent=83 // loop_header_branch
                  %286 = sbr.rel (%p284) target = $region98
                $region95: #{spectral_conv2d.1} parent=83 // loop_body
                  %v290 = vld [vmem:[%s288] sm:%s281]
                  %291 = vst [vmem:[%s289] sm:%s281] %v290
                  %v292 = vld [vmem:[%s288 + $0x8] sm:%s281]
                  %293 = vst [vmem:[%s289 + $0x4] sm:%s281] %v292
                $region96: #{spectral_conv2d.1} parent=83 // loop_footer
                  %s287 = sadd.s32 1, %s283
                $region97: #{spectral_conv2d.1} parent=83 // loop_footer_branch
                  %282 = sbr.rel target = $region93
                $region98: #{spectral_conv2d.1} parent=83 // loop_exit
                  _
              $region84: #{spectral_conv2d.1} parent=68 // pred_fallthru
                _
            $region69: #{spectral_conv2d.1} parent=64 // pred_fallthru
              _
            // Predicated region
            $region70: #{spectral_conv2d.1} parent=64 // pred_check
              _
            $region71: #{spectral_conv2d.1} parent=64 // pred_check_branch
              %255 = sbr.rel (0) target = $region73
            $region72: #{spectral_conv2d.1} parent=64 // pred_region
              %s257 = ssub.s32 16, 1
              loop: start=0, step=1, limit=1
              $region74: #{spectral_conv2d.1} parent=72 // loop_pre_header
                _
              $region75: #{spectral_conv2d.1} parent=72 // loop_header
                %s259 = sphi 0, %s263
                %p260 = scmp.ge.s32.totalorder %s259, 1
                %s264 = sphi %s249, %s249
                %s265 = sphi %s247, %s247
              $region76: #{spectral_conv2d.1} parent=72 // loop_header_branch
                %262 = sbr.rel (%p260) target = $region80
              $region77: #{spectral_conv2d.1} parent=72 // loop_body
                %v266 = vld [vmem:[%s264] sm:%s257]
                %267 = vst [vmem:[%s265] sm:%s257] %v266
                %v268 = vld [vmem:[%s264 + $0x8] sm:%s257]
                %269 = vst [vmem:[%s265 + $0x4] sm:%s257] %v268
              $region78: #{spectral_conv2d.1} parent=72 // loop_footer
                %s263 = sadd.s32 1, %s259
              $region79: #{spectral_conv2d.1} parent=72 // loop_footer_branch
                %258 = sbr.rel target = $region75
              $region80: #{spectral_conv2d.1} parent=72 // loop_exit
                _
            $region73: #{spectral_conv2d.1} parent=64 // pred_fallthru
              _
          $region65: #{spectral_conv2d.1} parent=60 // pred_fallthru
            _
          %294 = vnop
        $region61: #{spectral_conv2d.1} parent=15 // pred_fallthru
          _
        // Predicated region
        $region99: #{spectral_conv2d.1} parent=15 // pred_check
          %p295 = pneg %p84
        $region100: #{spectral_conv2d.1} parent=15 // pred_check_branch
          %297 = sbr.rel (%p295) target = $region102
        $region101: #{spectral_conv2d.1} parent=15 // pred_region
          %s298 = sand.u32 %s74, 1
          %s299 = sand.u32 %s74, 1
          %s300 = smul.addr %s299, 16
          %s301 = scalar_lea.vmem [#allocation4], %s300
          %s302 = smul.addr %s12, 4
          %s303 = scalar_lea.vmem %s2, %s302
          // Predicated region
          $region103: #{spectral_conv2d.1} parent=101 // pred_check
            _
          $region104: #{spectral_conv2d.1} parent=101 // pred_check_branch
            %305 = sbr.rel (0) target = $region106
          $region105: #{spectral_conv2d.1} parent=101 // pred_region
            // Predicated region
            $region107: #{spectral_conv2d.1} parent=105 // pred_check
              _
            $region108: #{spectral_conv2d.1} parent=105 // pred_check_branch
              %307 = sbr.rel target = $region110
            $region109: #{spectral_conv2d.1} parent=105 // pred_region
              // Predicated region
              $region122: #{spectral_conv2d.1} parent=109 // pred_check
                _
              $region123: #{spectral_conv2d.1} parent=109 // pred_check_branch
                %329 = sbr.rel (0) target = $region125
              $region124: #{spectral_conv2d.1} parent=109 // pred_region
                loop: start=0, step=1, limit=1
                $region126: #{spectral_conv2d.1} parent=124 // loop_pre_header
                  _
                $region127: #{spectral_conv2d.1} parent=124 // loop_header
                  %s331 = sphi 0, %s335
                  %p332 = scmp.ge.s32.totalorder %s331, 1
                  %s336 = sphi %s303, %s303
                  %s337 = sphi %s301, %s301
                $region128: #{spectral_conv2d.1} parent=124 // loop_header_branch
                  %334 = sbr.rel (%p332) target = $region132
                $region129: #{spectral_conv2d.1} parent=124 // loop_body
                  _
                $region130: #{spectral_conv2d.1} parent=124 // loop_footer
                  %s335 = sadd.s32 1, %s331
                $region131: #{spectral_conv2d.1} parent=124 // loop_footer_branch
                  %330 = sbr.rel target = $region127
                $region132: #{spectral_conv2d.1} parent=124 // loop_exit
                  _
                %s339 = ssub.s32 16, 1
                loop: start=0, step=1, limit=1
                $region133: #{spectral_conv2d.1} parent=124 // loop_pre_header
                  _
                $region134: #{spectral_conv2d.1} parent=124 // loop_header
                  %s341 = sphi 0, %s345
                  %p342 = scmp.ge.s32.totalorder %s341, 1
                  %s346 = sphi %s303, %s303
                  %s347 = sphi %s301, %s301
                $region135: #{spectral_conv2d.1} parent=124 // loop_header_branch
                  %344 = sbr.rel (%p342) target = $region139
                $region136: #{spectral_conv2d.1} parent=124 // loop_body
                  %v348 = vld [vmem:[%s346] sm:%s339]
                  %349 = vst [vmem:[%s347] sm:%s339] %v348
                  %v350 = vld [vmem:[%s346 + $0x8] sm:%s339]
                  %351 = vst [vmem:[%s347 + $0x4] sm:%s339] %v350
                  %v352 = vld [vmem:[%s346 + $0x10] sm:%s339]
                  %353 = vst [vmem:[%s347 + $0x8] sm:%s339] %v352
                  %v354 = vld [vmem:[%s346 + $0x18] sm:%s339]
                  %355 = vst [vmem:[%s347 + $0xc] sm:%s339] %v354
                $region137: #{spectral_conv2d.1} parent=124 // loop_footer
                  %s345 = sadd.s32 1, %s341
                $region138: #{spectral_conv2d.1} parent=124 // loop_footer_branch
                  %340 = sbr.rel target = $region134
                $region139: #{spectral_conv2d.1} parent=124 // loop_exit
                  _
              $region125: #{spectral_conv2d.1} parent=109 // pred_fallthru
                _
            $region110: #{spectral_conv2d.1} parent=105 // pred_fallthru
              _
            // Predicated region
            $region111: #{spectral_conv2d.1} parent=105 // pred_check
              _
            $region112: #{spectral_conv2d.1} parent=105 // pred_check_branch
              %309 = sbr.rel (0) target = $region114
            $region113: #{spectral_conv2d.1} parent=105 // pred_region
              %s311 = ssub.s32 16, 1
              loop: start=0, step=1, limit=1
              $region115: #{spectral_conv2d.1} parent=113 // loop_pre_header
                _
              $region116: #{spectral_conv2d.1} parent=113 // loop_header
                %s313 = sphi 0, %s317
                %p314 = scmp.ge.s32.totalorder %s313, 1
                %s318 = sphi %s303, %s303
                %s319 = sphi %s301, %s301
              $region117: #{spectral_conv2d.1} parent=113 // loop_header_branch
                %316 = sbr.rel (%p314) target = $region121
              $region118: #{spectral_conv2d.1} parent=113 // loop_body
                %v320 = vld [vmem:[%s318] sm:%s311]
                %321 = vst [vmem:[%s319] sm:%s311] %v320
                %v322 = vld [vmem:[%s318 + $0x8] sm:%s311]
                %323 = vst [vmem:[%s319 + $0x4] sm:%s311] %v322
                %v324 = vld [vmem:[%s318 + $0x10] sm:%s311]
                %325 = vst [vmem:[%s319 + $0x8] sm:%s311] %v324
                %v326 = vld [vmem:[%s318 + $0x18] sm:%s311]
                %327 = vst [vmem:[%s319 + $0xc] sm:%s311] %v326
              $region119: #{spectral_conv2d.1} parent=113 // loop_footer
                %s317 = sadd.s32 1, %s313
              $region120: #{spectral_conv2d.1} parent=113 // loop_footer_branch
                %312 = sbr.rel target = $region116
              $region121: #{spectral_conv2d.1} parent=113 // loop_exit
                _
            $region114: #{spectral_conv2d.1} parent=105 // pred_fallthru
              _
          $region106: #{spectral_conv2d.1} parent=101 // pred_fallthru
            _
          %356 = vnop
        $region102: #{spectral_conv2d.1} parent=15 // pred_fallthru
          _
        // Predicated region
        $region140: #{spectral_conv2d.1} parent=15 // pred_check
          %p357 = pneg %p110
        $region141: #{spectral_conv2d.1} parent=15 // pred_check_branch
          %359 = sbr.rel (%p357) target = $region143
        $region142: #{spectral_conv2d.1} parent=15 // pred_region
          %s360 = sand.u32 %s100, 1
          %s361 = sand.u32 %s100, 1
          %s362 = smul.addr %s361, 16
          %s363 = scalar_lea.vmem [#allocation5], %s362
          %s364 = smul.addr %s12, 4
          %s365 = scalar_lea.vmem %s3, %s364
          // Predicated region
          $region144: #{spectral_conv2d.1} parent=142 // pred_check
            _
          $region145: #{spectral_conv2d.1} parent=142 // pred_check_branch
            %367 = sbr.rel (0) target = $region147
          $region146: #{spectral_conv2d.1} parent=142 // pred_region
            // Predicated region
            $region148: #{spectral_conv2d.1} parent=146 // pred_check
              _
            $region149: #{spectral_conv2d.1} parent=146 // pred_check_branch
              %369 = sbr.rel target = $region151
            $region150: #{spectral_conv2d.1} parent=146 // pred_region
              // Predicated region
              $region163: #{spectral_conv2d.1} parent=150 // pred_check
                _
              $region164: #{spectral_conv2d.1} parent=150 // pred_check_branch
                %391 = sbr.rel (0) target = $region166
              $region165: #{spectral_conv2d.1} parent=150 // pred_region
                loop: start=0, step=1, limit=1
                $region167: #{spectral_conv2d.1} parent=165 // loop_pre_header
                  _
                $region168: #{spectral_conv2d.1} parent=165 // loop_header
                  %s393 = sphi 0, %s397
                  %p394 = scmp.ge.s32.totalorder %s393, 1
                  %s398 = sphi %s365, %s365
                  %s399 = sphi %s363, %s363
                $region169: #{spectral_conv2d.1} parent=165 // loop_header_branch
                  %396 = sbr.rel (%p394) target = $region173
                $region170: #{spectral_conv2d.1} parent=165 // loop_body
                  _
                $region171: #{spectral_conv2d.1} parent=165 // loop_footer
                  %s397 = sadd.s32 1, %s393
                $region172: #{spectral_conv2d.1} parent=165 // loop_footer_branch
                  %392 = sbr.rel target = $region168
                $region173: #{spectral_conv2d.1} parent=165 // loop_exit
                  _
                %s401 = ssub.s32 16, 1
                loop: start=0, step=1, limit=1
                $region174: #{spectral_conv2d.1} parent=165 // loop_pre_header
                  _
                $region175: #{spectral_conv2d.1} parent=165 // loop_header
                  %s403 = sphi 0, %s407
                  %p404 = scmp.ge.s32.totalorder %s403, 1
                  %s408 = sphi %s365, %s365
                  %s409 = sphi %s363, %s363
                $region176: #{spectral_conv2d.1} parent=165 // loop_header_branch
                  %406 = sbr.rel (%p404) target = $region180
                $region177: #{spectral_conv2d.1} parent=165 // loop_body
                  %v410 = vld [vmem:[%s408] sm:%s401]
                  %411 = vst [vmem:[%s409] sm:%s401] %v410
                  %v412 = vld [vmem:[%s408 + $0x8] sm:%s401]
                  %413 = vst [vmem:[%s409 + $0x4] sm:%s401] %v412
                  %v414 = vld [vmem:[%s408 + $0x10] sm:%s401]
                  %415 = vst [vmem:[%s409 + $0x8] sm:%s401] %v414
                  %v416 = vld [vmem:[%s408 + $0x18] sm:%s401]
                  %417 = vst [vmem:[%s409 + $0xc] sm:%s401] %v416
                $region178: #{spectral_conv2d.1} parent=165 // loop_footer
                  %s407 = sadd.s32 1, %s403
                $region179: #{spectral_conv2d.1} parent=165 // loop_footer_branch
                  %402 = sbr.rel target = $region175
                $region180: #{spectral_conv2d.1} parent=165 // loop_exit
                  _
              $region166: #{spectral_conv2d.1} parent=150 // pred_fallthru
                _
            $region151: #{spectral_conv2d.1} parent=146 // pred_fallthru
              _
            // Predicated region
            $region152: #{spectral_conv2d.1} parent=146 // pred_check
              _
            $region153: #{spectral_conv2d.1} parent=146 // pred_check_branch
              %371 = sbr.rel (0) target = $region155
            $region154: #{spectral_conv2d.1} parent=146 // pred_region
              %s373 = ssub.s32 16, 1
              loop: start=0, step=1, limit=1
              $region156: #{spectral_conv2d.1} parent=154 // loop_pre_header
                _
              $region157: #{spectral_conv2d.1} parent=154 // loop_header
                %s375 = sphi 0, %s379
                %p376 = scmp.ge.s32.totalorder %s375, 1
                %s380 = sphi %s365, %s365
                %s381 = sphi %s363, %s363
              $region158: #{spectral_conv2d.1} parent=154 // loop_header_branch
                %378 = sbr.rel (%p376) target = $region162
              $region159: #{spectral_conv2d.1} parent=154 // loop_body
                %v382 = vld [vmem:[%s380] sm:%s373]
                %383 = vst [vmem:[%s381] sm:%s373] %v382
                %v384 = vld [vmem:[%s380 + $0x8] sm:%s373]
                %385 = vst [vmem:[%s381 + $0x4] sm:%s373] %v384
                %v386 = vld [vmem:[%s380 + $0x10] sm:%s373]
                %387 = vst [vmem:[%s381 + $0x8] sm:%s373] %v386
                %v388 = vld [vmem:[%s380 + $0x18] sm:%s373]
                %389 = vst [vmem:[%s381 + $0xc] sm:%s373] %v388
              $region160: #{spectral_conv2d.1} parent=154 // loop_footer
                %s379 = sadd.s32 1, %s375
              $region161: #{spectral_conv2d.1} parent=154 // loop_footer_branch
                %374 = sbr.rel target = $region157
              $region162: #{spectral_conv2d.1} parent=154 // loop_exit
                _
            $region155: #{spectral_conv2d.1} parent=146 // pred_fallthru
              _
          $region147: #{spectral_conv2d.1} parent=142 // pred_fallthru
            _
          %418 = vnop
        $region143: #{spectral_conv2d.1} parent=15 // pred_fallthru
          _
      $region16: #{spectral_conv2d.1} parent=5 // pred_fallthru
        _
      %p419 = scmp.le.s32.totalorder 1, %s12
      %p420 = scmp.lt.s32.totalorder %s12, 3
      %p421 = pnand %p419, %p420
      %p422 = pneg %p421
      // Predicated region
      $region181: #{spectral_conv2d.1} parent=5 // pred_check
        _
      $region182: #{spectral_conv2d.1} parent=5 // pred_check_branch
        %424 = sbr.rel (%p421) target = $region184
      $region183: #{spectral_conv2d.1} parent=5 // pred_region
        %s425 = ssub.s32 %s12, 1
        %s426 = sand.u32 %s25, 1
        %s427 = sand.u32 %s25, 1
        %s428 = smul.addr %s427, 8
        %s429 = scalar_lea.vmem [#allocation2], %s428
        // Predicated region
        $region185: #{spectral_conv2d.1} parent=183 // pred_check
          %p430 = pneg %p38
        $region186: #{spectral_conv2d.1} parent=183 // pred_check_branch
          %432 = sbr.rel (%p430) target = $region188
        $region187: #{spectral_conv2d.1} parent=183 // pred_region
          _
        $region188: #{spectral_conv2d.1} parent=183 // pred_fallthru
          _
        %s433 = sand.u32 %s51, 1
        %s434 = sand.u32 %s51, 1
        %s435 = smul.addr %s434, 8
        %s436 = scalar_lea.vmem [#allocation3], %s435
        // Predicated region
        $region189: #{spectral_conv2d.1} parent=183 // pred_check
          %p437 = pneg %p64
        $region190: #{spectral_conv2d.1} parent=183 // pred_check_branch
          %439 = sbr.rel (%p437) target = $region192
        $region191: #{spectral_conv2d.1} parent=183 // pred_region
          _
        $region192: #{spectral_conv2d.1} parent=183 // pred_fallthru
          _
        %s440 = sand.u32 %s77, 1
        %s441 = sand.u32 %s77, 1
        %s442 = smul.addr %s441, 16
        %s443 = scalar_lea.vmem [#allocation4], %s442
        // Predicated region
        $region193: #{spectral_conv2d.1} parent=183 // pred_check
          %p444 = pneg %p90
        $region194: #{spectral_conv2d.1} parent=183 // pred_check_branch
          %446 = sbr.rel (%p444) target = $region196
        $region195: #{spectral_conv2d.1} parent=183 // pred_region
          _
        $region196: #{spectral_conv2d.1} parent=183 // pred_fallthru
          _
        %s447 = sand.u32 %s103, 1
        %s448 = sand.u32 %s103, 1
        %s449 = smul.addr %s448, 16
        %s450 = scalar_lea.vmem [#allocation5], %s449
        // Predicated region
        $region197: #{spectral_conv2d.1} parent=183 // pred_check
          %p451 = pneg %p116
        $region198: #{spectral_conv2d.1} parent=183 // pred_check_branch
          %453 = sbr.rel (%p451) target = $region200
        $region199: #{spectral_conv2d.1} parent=183 // pred_region
          _
        $region200: #{spectral_conv2d.1} parent=183 // pred_fallthru
          _
        %s454 = sand.u32 %s25, 1
        %s455 = sand.u32 %s25, 1
        %s456 = smul.addr %s455, 8
        %s457 = scalar_lea.vmem [#allocation2], %s456
        %p458 = pneg %p38
        %p459 = pneg %p35
        %s460 = sand.u32 %s51, 1
        %s461 = sand.u32 %s51, 1
        %s462 = smul.addr %s461, 8
        %s463 = scalar_lea.vmem [#allocation3], %s462
        %p464 = pneg %p64
        %p465 = pneg %p61
        %s466 = sand.u32 %s77, 1
        %s467 = sand.u32 %s77, 1
        %s468 = smul.addr %s467, 16
        %s469 = scalar_lea.vmem [#allocation4], %s468
        %p470 = pneg %p90
        %p471 = pneg %p87
        %s472 = sand.u32 %s103, 1
        %s473 = sand.u32 %s103, 1
        %s474 = smul.addr %s473, 16
        %s475 = scalar_lea.vmem [#allocation5], %s474
        %p476 = pneg %p116
        %p477 = pneg %p113
        %p478 = pneg %p142
        %p479 = pneg %p139
        %s480 = sand.u32 %s129, 1
        %s481 = sand.u32 %s129, 1
        %s482 = smul.addr %s481, 8
        %s483 = scalar_lea.vmem [#allocation6], %s482
        %p484 = pneg %p168
        %p485 = pneg %p165
        %s486 = sand.u32 %s155, 1
        %s487 = sand.u32 %s155, 1
        %s488 = smul.addr %s487, 8
        %s489 = scalar_lea.vmem [#allocation7], %s488
        %v490 = vld [vmem:[%s429] sm:$0xf]
        %v491 = vld [vmem:[%s429 + $0x4] sm:$0xf]
        %v492 = vld [vmem:[%s436] sm:$0xf]
        %v493 = vld [vmem:[%s436 + $0x4] sm:$0xf]
        %v494 = vld [vmem:[%s443] sm:$0xf]
        %v495 = vld [vmem:[%s443 + $0x4] sm:$0xf]
        %v496 = vld [vmem:[%s443 + $0x8] sm:$0xf]
        %v497 = vld [vmem:[%s443 + $0xc] sm:$0xf]
        %v498 = vld [vmem:[%s450] sm:$0xf]
        %v499 = vld [vmem:[%s450 + $0x4] sm:$0xf]
        %v500 = vld [vmem:[%s450 + $0x8] sm:$0xf]
        %v501 = vld [vmem:[%s450 + $0xc] sm:$0xf]
        %v502 = vperm.slane %v490, 0
        %v503 = vperm.slane %v491, 0
        %v504 = vmul.f32 %v502, %v494
        %v505 = vmul.f32 %v503, %v494
        %v506 = vadd.f32 %v504, 0.0
        %v507 = vadd.f32 %v505, 0.0
        %v508 = vperm.slane %v492, 0
        %v509 = vperm.slane %v493, 0
        %v510 = vmul.f32 %v508, %v498
        %v511 = vmul.f32 %v509, %v498
        %v512 = vsub.f32 %v506, %v510
        %v513 = vsub.f32 %v507, %v511
        %v514 = vmul.f32 %v502, %v498
        %v515 = vmul.f32 %v503, %v498
        %v516 = vadd.f32 %v514, 0.0
        %v517 = vadd.f32 %v515, 0.0
        %v518 = vmul.f32 %v508, %v494
        %v519 = vmul.f32 %v509, %v494
        %v520 = vadd.f32 %v516, %v518
        %v521 = vadd.f32 %v517, %v519
        %v522 = vperm.slane %v490, 1
        %v523 = vperm.slane %v491, 1
        %v524 = vmul.f32 %v522, %v495
        %v525 = vmul.f32 %v523, %v495
        %v526 = vadd.f32 %v512, %v524
        %v527 = vadd.f32 %v513, %v525
        %v528 = vperm.slane %v492, 1
        %v529 = vperm.slane %v493, 1
        %v530 = vmul.f32 %v528, %v499
        %v531 = vmul.f32 %v529, %v499
        %v532 = vsub.f32 %v526, %v530
        %v533 = vsub.f32 %v527, %v531
        %v534 = vmul.f32 %v522, %v499
        %v535 = vmul.f32 %v523, %v499
        %v536 = vadd.f32 %v520, %v534
        %v537 = vadd.f32 %v521, %v535
        %v538 = vmul.f32 %v528, %v495
        %v539 = vmul.f32 %v529, %v495
        %v540 = vadd.f32 %v536, %v538
        %v541 = vadd.f32 %v537, %v539
        %v542 = vperm.slane %v490, 2
        %v543 = vperm.slane %v491, 2
        %v544 = vmul.f32 %v542, %v496
        %v545 = vmul.f32 %v543, %v496
        %v546 = vadd.f32 %v532, %v544
        %v547 = vadd.f32 %v533, %v545
        %v548 = vperm.slane %v492, 2
        %v549 = vperm.slane %v493, 2
        %v550 = vmul.f32 %v548, %v500
        %v551 = vmul.f32 %v549, %v500
        %v552 = vsub.f32 %v546, %v550
        %v553 = vsub.f32 %v547, %v551
        %v554 = vmul.f32 %v542, %v500
        %v555 = vmul.f32 %v543, %v500
        %v556 = vadd.f32 %v540, %v554
        %v557 = vadd.f32 %v541, %v555
        %v558 = vmul.f32 %v548, %v496
        %v559 = vmul.f32 %v549, %v496
        %v560 = vadd.f32 %v556, %v558
        %v561 = vadd.f32 %v557, %v559
        %v562 = vperm.slane %v490, 3
        %v563 = vperm.slane %v491, 3
        %v564 = vmul.f32 %v562, %v497
        %v565 = vmul.f32 %v563, %v497
        %v566 = vadd.f32 %v552, %v564
        %v567 = vadd.f32 %v553, %v565
        %v568 = vperm.slane %v492, 3
        %v569 = vperm.slane %v493, 3
        %v570 = vmul.f32 %v568, %v501
        %v571 = vmul.f32 %v569, %v501
        %v572 = vsub.f32 %v566, %v570
        %v573 = vsub.f32 %v567, %v571
        %v574 = vmul.f32 %v562, %v501
        %v575 = vmul.f32 %v563, %v501
        %v576 = vadd.f32 %v560, %v574
        %v577 = vadd.f32 %v561, %v575
        %v578 = vmul.f32 %v568, %v497
        %v579 = vmul.f32 %v569, %v497
        %v580 = vadd.f32 %v576, %v578
        %v581 = vadd.f32 %v577, %v579
        %582 = vst [vmem:[%s483] sm:$0xf] %v572
        %583 = vst [vmem:[%s483 + $0x4] sm:$0xf] %v573
        %584 = vst [vmem:[%s489] sm:$0xf] %v580
        %585 = vst [vmem:[%s489 + $0x4] sm:$0xf] %v581
        %s586 = sand.u32 %s129, 1
        %s587 = sand.u32 %s129, 1
        %s588 = smul.addr %s587, 8
        %s589 = scalar_lea.vmem [#allocation6], %s588
        %s590 = sand.u32 %s155, 1
        %s591 = sand.u32 %s155, 1
        %s592 = smul.addr %s591, 8
        %s593 = scalar_lea.vmem [#allocation7], %s592
        // Predicated region
        $region201: #{spectral_conv2d.1} parent=183 // pred_check
          %p594 = pneg %p139
        $region202: #{spectral_conv2d.1} parent=183 // pred_check_branch
          %596 = sbr.rel (%p594) target = $region204
        $region203: #{spectral_conv2d.1} parent=183 // pred_region
          %s597 = smul.addr %s17, 4
          %s598 = scalar_lea.vmem %s4, %s597
          // Predicated region
          $region205: #{spectral_conv2d.1} parent=203 // pred_check
            _
          $region206: #{spectral_conv2d.1} parent=203 // pred_check_branch
            %600 = sbr.rel (0) target = $region208
          $region207: #{spectral_conv2d.1} parent=203 // pred_region
            // Predicated region
            $region209: #{spectral_conv2d.1} parent=207 // pred_check
              _
            $region210: #{spectral_conv2d.1} parent=207 // pred_check_branch
              %602 = sbr.rel target = $region212
            $region211: #{spectral_conv2d.1} parent=207 // pred_region
              // Predicated region
              $region224: #{spectral_conv2d.1} parent=211 // pred_check
                _
              $region225: #{spectral_conv2d.1} parent=211 // pred_check_branch
                %620 = sbr.rel (0) target = $region227
              $region226: #{spectral_conv2d.1} parent=211 // pred_region
                loop: start=0, step=1, limit=1
                $region228: #{spectral_conv2d.1} parent=226 // loop_pre_header
                  _
                $region229: #{spectral_conv2d.1} parent=226 // loop_header
                  %s622 = sphi 0, %s626
                  %p623 = scmp.ge.s32.totalorder %s622, 1
                  %s627 = sphi %s589, %s589
                  %s628 = sphi %s598, %s598
                $region230: #{spectral_conv2d.1} parent=226 // loop_header_branch
                  %625 = sbr.rel (%p623) target = $region234
                $region231: #{spectral_conv2d.1} parent=226 // loop_body
                  _
                $region232: #{spectral_conv2d.1} parent=226 // loop_footer
                  %s626 = sadd.s32 1, %s622
                $region233: #{spectral_conv2d.1} parent=226 // loop_footer_branch
                  %621 = sbr.rel target = $region229
                $region234: #{spectral_conv2d.1} parent=226 // loop_exit
                  _
                %s630 = ssub.s32 16, 1
                loop: start=0, step=1, limit=1
                $region235: #{spectral_conv2d.1} parent=226 // loop_pre_header
                  _
                $region236: #{spectral_conv2d.1} parent=226 // loop_header
                  %s632 = sphi 0, %s636
                  %p633 = scmp.ge.s32.totalorder %s632, 1
                  %s637 = sphi %s589, %s589
                  %s638 = sphi %s598, %s598
                $region237: #{spectral_conv2d.1} parent=226 // loop_header_branch
                  %635 = sbr.rel (%p633) target = $region241
                $region238: #{spectral_conv2d.1} parent=226 // loop_body
                  %v639 = vld [vmem:[%s637] sm:%s630]
                  %640 = vst [vmem:[%s638] sm:%s630] %v639
                  %v641 = vld [vmem:[%s637 + $0x4] sm:%s630]
                  %642 = vst [vmem:[%s638 + $0x8] sm:%s630] %v641
                $region239: #{spectral_conv2d.1} parent=226 // loop_footer
                  %s636 = sadd.s32 1, %s632
                $region240: #{spectral_conv2d.1} parent=226 // loop_footer_branch
                  %631 = sbr.rel target = $region236
                $region241: #{spectral_conv2d.1} parent=226 // loop_exit
                  _
              $region227: #{spectral_conv2d.1} parent=211 // pred_fallthru
                _
            $region212: #{spectral_conv2d.1} parent=207 // pred_fallthru
              _
            // Predicated region
            $region213: #{spectral_conv2d.1} parent=207 // pred_check
              _
            $region214: #{spectral_conv2d.1} parent=207 // pred_check_branch
              %604 = sbr.rel (0) target = $region216
            $region215: #{spectral_conv2d.1} parent=207 // pred_region
              %s606 = ssub.s32 16, 1
              loop: start=0, step=1, limit=1
              $region217: #{spectral_conv2d.1} parent=215 // loop_pre_header
                _
              $region218: #{spectral_conv2d.1} parent=215 // loop_header
                %s608 = sphi 0, %s612
                %p609 = scmp.ge.s32.totalorder %s608, 1
                %s613 = sphi %s589, %s589
                %s614 = sphi %s598, %s598
              $region219: #{spectral_conv2d.1} parent=215 // loop_header_branch
                %611 = sbr.rel (%p609) target = $region223
              $region220: #{spectral_conv2d.1} parent=215 // loop_body
                %v615 = vld [vmem:[%s613] sm:%s606]
                %616 = vst [vmem:[%s614] sm:%s606] %v615
                %v617 = vld [vmem:[%s613 + $0x4] sm:%s606]
                %618 = vst [vmem:[%s614 + $0x8] sm:%s606] %v617
              $region221: #{spectral_conv2d.1} parent=215 // loop_footer
                %s612 = sadd.s32 1, %s608
              $region222: #{spectral_conv2d.1} parent=215 // loop_footer_branch
                %607 = sbr.rel target = $region218
              $region223: #{spectral_conv2d.1} parent=215 // loop_exit
                _
            $region216: #{spectral_conv2d.1} parent=207 // pred_fallthru
              _
          $region208: #{spectral_conv2d.1} parent=203 // pred_fallthru
            _
          %643 = vnop
        $region204: #{spectral_conv2d.1} parent=183 // pred_fallthru
          _
        // Predicated region
        $region242: #{spectral_conv2d.1} parent=183 // pred_check
          %p644 = pneg %p165
        $region243: #{spectral_conv2d.1} parent=183 // pred_check_branch
          %646 = sbr.rel (%p644) target = $region245
        $region244: #{spectral_conv2d.1} parent=183 // pred_region
          %s647 = smul.addr %s17, 4
          %s648 = scalar_lea.vmem %s5, %s647
          // Predicated region
          $region246: #{spectral_conv2d.1} parent=244 // pred_check
            _
          $region247: #{spectral_conv2d.1} parent=244 // pred_check_branch
            %650 = sbr.rel (0) target = $region249
          $region248: #{spectral_conv2d.1} parent=244 // pred_region
            // Predicated region
            $region250: #{spectral_conv2d.1} parent=248 // pred_check
              _
            $region251: #{spectral_conv2d.1} parent=248 // pred_check_branch
              %652 = sbr.rel target = $region253
            $region252: #{spectral_conv2d.1} parent=248 // pred_region
              // Predicated region
              $region265: #{spectral_conv2d.1} parent=252 // pred_check
                _
              $region266: #{spectral_conv2d.1} parent=252 // pred_check_branch
                %670 = sbr.rel (0) target = $region268
              $region267: #{spectral_conv2d.1} parent=252 // pred_region
                loop: start=0, step=1, limit=1
                $region269: #{spectral_conv2d.1} parent=267 // loop_pre_header
                  _
                $region270: #{spectral_conv2d.1} parent=267 // loop_header
                  %s672 = sphi 0, %s676
                  %p673 = scmp.ge.s32.totalorder %s672, 1
                  %s677 = sphi %s593, %s593
                  %s678 = sphi %s648, %s648
                $region271: #{spectral_conv2d.1} parent=267 // loop_header_branch
                  %675 = sbr.rel (%p673) target = $region275
                $region272: #{spectral_conv2d.1} parent=267 // loop_body
                  _
                $region273: #{spectral_conv2d.1} parent=267 // loop_footer
                  %s676 = sadd.s32 1, %s672
                $region274: #{spectral_conv2d.1} parent=267 // loop_footer_branch
                  %671 = sbr.rel target = $region270
                $region275: #{spectral_conv2d.1} parent=267 // loop_exit
                  _
                %s680 = ssub.s32 16, 1
                loop: start=0, step=1, limit=1
                $region276: #{spectral_conv2d.1} parent=267 // loop_pre_header
                  _
                $region277: #{spectral_conv2d.1} parent=267 // loop_header
                  %s682 = sphi 0, %s686
                  %p683 = scmp.ge.s32.totalorder %s682, 1
                  %s687 = sphi %s593, %s593
                  %s688 = sphi %s648, %s648
                $region278: #{spectral_conv2d.1} parent=267 // loop_header_branch
                  %685 = sbr.rel (%p683) target = $region282
                $region279: #{spectral_conv2d.1} parent=267 // loop_body
                  %v689 = vld [vmem:[%s687] sm:%s680]
                  %690 = vst [vmem:[%s688] sm:%s680] %v689
                  %v691 = vld [vmem:[%s687 + $0x4] sm:%s680]
                  %692 = vst [vmem:[%s688 + $0x8] sm:%s680] %v691
                $region280: #{spectral_conv2d.1} parent=267 // loop_footer
                  %s686 = sadd.s32 1, %s682
                $region281: #{spectral_conv2d.1} parent=267 // loop_footer_branch
                  %681 = sbr.rel target = $region277
                $region282: #{spectral_conv2d.1} parent=267 // loop_exit
                  _
              $region268: #{spectral_conv2d.1} parent=252 // pred_fallthru
                _
            $region253: #{spectral_conv2d.1} parent=248 // pred_fallthru
              _
            // Predicated region
            $region254: #{spectral_conv2d.1} parent=248 // pred_check
              _
            $region255: #{spectral_conv2d.1} parent=248 // pred_check_branch
              %654 = sbr.rel (0) target = $region257
            $region256: #{spectral_conv2d.1} parent=248 // pred_region
              %s656 = ssub.s32 16, 1
              loop: start=0, step=1, limit=1
              $region258: #{spectral_conv2d.1} parent=256 // loop_pre_header
                _
              $region259: #{spectral_conv2d.1} parent=256 // loop_header
                %s658 = sphi 0, %s662
                %p659 = scmp.ge.s32.totalorder %s658, 1
                %s663 = sphi %s593, %s593
                %s664 = sphi %s648, %s648
              $region260: #{spectral_conv2d.1} parent=256 // loop_header_branch
                %661 = sbr.rel (%p659) target = $region264
              $region261: #{spectral_conv2d.1} parent=256 // loop_body
                %v665 = vld [vmem:[%s663] sm:%s656]
                %666 = vst [vmem:[%s664] sm:%s656] %v665
                %v667 = vld [vmem:[%s663 + $0x4] sm:%s656]
                %668 = vst [vmem:[%s664 + $0x8] sm:%s656] %v667
              $region262: #{spectral_conv2d.1} parent=256 // loop_footer
                %s662 = sadd.s32 1, %s658
              $region263: #{spectral_conv2d.1} parent=256 // loop_footer_branch
                %657 = sbr.rel target = $region259
              $region264: #{spectral_conv2d.1} parent=256 // loop_exit
                _
            $region257: #{spectral_conv2d.1} parent=248 // pred_fallthru
              _
          $region249: #{spectral_conv2d.1} parent=244 // pred_fallthru
            _
          %693 = vnop
        $region245: #{spectral_conv2d.1} parent=183 // pred_fallthru
          _
      $region184: #{spectral_conv2d.1} parent=5 // pred_fallthru
        _
      %p694 = scmp.le.s32.totalorder 2, %s12
      // Predicated region
      $region283: #{spectral_conv2d.1} parent=5 // pred_check
        %p695 = pneg %p694
      $region284: #{spectral_conv2d.1} parent=5 // pred_check_branch
        %697 = sbr.rel (%p695) target = $region286
      $region285: #{spectral_conv2d.1} parent=5 // pred_region
        %s698 = ssub.s32 %s12, 2
        // Predicated region
        $region287: #{spectral_conv2d.1} parent=285 // pred_check
          %p699 = pneg %p145
        $region288: #{spectral_conv2d.1} parent=285 // pred_check_branch
          %701 = sbr.rel (%p699) target = $region290
        $region289: #{spectral_conv2d.1} parent=285 // pred_region
          %s702 = sand.u32 %s130, 1
          %s703 = sand.u32 %s130, 1
          %s704 = smul.addr %s703, 8
          %s705 = scalar_lea.vmem [#allocation6], %s704
        $region290: #{spectral_conv2d.1} parent=285 // pred_fallthru
          _
        // Predicated region
        $region291: #{spectral_conv2d.1} parent=285 // pred_check
          %p706 = pneg %p171
        $region292: #{spectral_conv2d.1} parent=285 // pred_check_branch
          %708 = sbr.rel (%p706) target = $region294
        $region293: #{spectral_conv2d.1} parent=285 // pred_region
          %s709 = sand.u32 %s156, 1
          %s710 = sand.u32 %s156, 1
          %s711 = smul.addr %s710, 8
          %s712 = scalar_lea.vmem [#allocation7], %s711
        $region294: #{spectral_conv2d.1} parent=285 // pred_fallthru
          _
      $region286: #{spectral_conv2d.1} parent=5 // pred_fallthru
        _
    $region6: #{spectral_conv2d.1} parent=1 // loop_footer
      %s16 = sadd.s32 1, %s12
    $region7: #{spectral_conv2d.1} parent=1 // loop_footer_branch
      %11 = sbr.rel target = $region3
    $region8: #{spectral_conv2d.1} parent=1 // loop_exit
      _

</llo_original>
